<compile_context>
chip_gen: v5e
topology: v5e:2x2
jax: 0.10.0
libtpu: 0.0.40
codegen_flags: <defaults>
</compile_context>

<pallas_src>
import functools
import math
from collections import namedtuple

import numpy as np
import jax
import jax.numpy as jnp
from jax.experimental import pallas as pl
from jax.experimental.pallas import tpu as pltpu

_LANE = 128
_BIN_ALIGN = 128        # pad bin counts to multiples of 128 (zero pad is exact)
_EW_LANES = 512         # Stage B lane width
_EW_MAX_ROWS = 256      # Stage B block = (256, 512) f32 = 512 KiB / operand / buffer


def _round_up(n, m):
    return ((n + m - 1) // m) * m


def _vmem_capacity_bytes():
    # Capability probe only (NOT a guard around kernel compilation): fall back
    # to the most conservative per-TensorCore VMEM size (v7x, 64 MiB) if the
    # query is unavailable on this JAX build / backend.
    try:
        cap = int(pltpu.get_tpu_info().vmem_capacity_bytes)
        if cap > 0:
            return cap
    except Exception:
        pass
    return 64 * 2 ** 20


def _row(a, n, npad):
    """First n entries laid out as a (1, npad) f32 row (nodes on lanes)."""
    a = jnp.asarray(a, jnp.float32)[:n]
    return jnp.pad(a, (0, npad - n)).reshape(1, npad)


# ---------------------------------------------------------------------------
# Stage A: fused node-area-from-utilization-map + area increment + statistics
# ---------------------------------------------------------------------------
def _node_area_stats_kernel(px_ref, py_ref, sx_ref, sy_ref, *rest,
                            xl, yl, groups, n_maps, has_route, has_pin,
                            matmul_dtype):
    n_groups = len(groups)
    util_refs = rest[:n_groups]
    incr_ref = rest[n_groups]
    sums_ref = rest[n_groups + 1]

    x_min = px_ref[...]                      # (1, TN) -- nodes on the lane axis
    y_min = py_ref[...]
    sx = sx_ref[...]
    sy = sy_ref[...]
    x_max = x_min + sx
    y_max = y_min + sy
    old_area = sx * sy                       # (1, TN)

    opt_areas = []                           # per logical map, (route, pin) order
    for (nbx, nby, bsx, bsy, count), u_ref in zip(groups, util_refs):
        # Bin lower edges as (B, 1) columns; broadcast against (1, TN) nodes.
        ex_lo = (jax.lax.broadcasted_iota(jnp.int32, (nbx, 1), 0)
                 .astype(jnp.float32) * bsx + xl)
        ey_lo = (jax.lax.broadcasted_iota(jnp.int32, (nby, 1), 0)
                 .astype(jnp.float32) * bsy + yl)
        ox = jnp.maximum(jnp.minimum(x_max, ex_lo + bsx)
                         - jnp.maximum(x_min, ex_lo), 0.0)          # (Bx, TN)
        oy = jnp.maximum(jnp.minimum(y_max, ey_lo + bsy)
                         - jnp.maximum(y_min, ey_lo), 0.0)          # (By, TN)
        # One MXU matmul per operand (route & pin maps stacked along Bx when
        # their grids match):  tmp[bx, n] = sum_by util[bx, by] * oy[by, n].
        tmp = jnp.dot(u_ref[...].astype(matmul_dtype), oy.astype(matmul_dtype),
                      preferred_element_type=jnp.float32)           # (cnt*Bx, TN)
        for j in range(count):
            part = tmp[j * nbx:(j + 1) * nbx, :]                    # clean tile slice
            opt_areas.append(jnp.sum(ox * part, axis=0, keepdims=True))  # (1, TN)

    best = opt_areas[0] if n_maps == 1 else jnp.maximum(opt_areas[0], opt_areas[1])
    incr = jnp.maximum(best - old_area, 0.0)
    incr_ref[...] = incr                                            # (1, TN) lane-dense

    # Per-step partial statistics written to a disjoint (1, 8, 128) slab so the
    # node-grid axis can stay "parallel" (v7x megacore; no carried accumulator):
    #   row 0: sum(old_movable_area)       row 1: sum(area_increment)
    #   row 2: sum(relu(route_opt - old))  row 3: sum(relu(pin_opt - old))
    rows = jax.lax.broadcasted_iota(jnp.int32, (1, 8, _LANE), 1)
    contrib = jnp.where(rows == 0, jnp.sum(old_area), 0.0)
    contrib = contrib + jnp.where(rows == 1, jnp.sum(incr), 0.0)
    if has_route:
        contrib = contrib + jnp.where(
            rows == 2, jnp.sum(jnp.maximum(opt_areas[0] - old_area, 0.0)), 0.0)
    if has_pin:
        contrib = contrib + jnp.where(
            rows == 3, jnp.sum(jnp.maximum(opt_areas[-1] - old_area, 0.0)), 0.0)
    sums_ref[...] = contrib


def _choose_node_tile(groups, num_movable, budget_bytes, mm_itemsize):
    """Nodes per grid step: large, lane-aligned, bounded by the VMEM budget."""
    per_node = 0
    per_node += 4 * 8 * 4 * 2    # px/py/sx/sy (1,TN) f32 blocks, 8-sublane pad, 2 buffers
    per_node += 8 * 4 * 2        # incr output (1,TN) block, same padding, 2 buffers
    for nbx, nby, _, _, count in groups:
        per_node += 4 * nbx                      # ox (Bx, TN) f32
        per_node += 4 * nby                      # oy (By, TN) f32
        if mm_itemsize != 4:
            per_node += mm_itemsize * nby        # oy cast copy for the MXU
        per_node += 4 * count * nbx              # tmp = U @ oy (count*Bx, TN) f32
        per_node += 4 * nbx                      # ox * tmp product temporary
    per_node = int(per_node * 1.25) + 1          # compiler internal-scratch fudge
    tn = 2048
    while tn > 256 and tn * per_node > budget_bytes:
        tn //= 2
    return min(tn, _round_up(max(num_movable, 1), 256))


# ---------------------------------------------------------------------------
# Stage B: lane-dense elementwise kernels
# ---------------------------------------------------------------------------
def _inflate_movable_kernel(scale_ref, px_ref, py_ref, sx_ref, sy_ref, incr_ref,
                            opx_ref, opy_ref, osx_ref, osy_ref, ratio_ref):
    scale = scale_ref[0, 0]
    sx = sx_ref[...]
    sy = sy_ref[...]
    old = sx * sy
    new = old + incr_ref[...] * scale
    valid = old > 0.0
    ratio = jnp.where(valid, jnp.sqrt(new / jnp.where(valid, old, 1.0)), 1.0)
    nsx = sx * ratio
    nsy = sy * ratio
    opx_ref[...] = px_ref[...] + 0.5 * (sx - nsx)
    opy_ref[...] = py_ref[...] + 0.5 * (sy - nsy)
    osx_ref[...] = nsx
    osy_ref[...] = nsy
    ratio_ref[...] = ratio


def _inflate_uniform_kernel(ratio_ref, px_ref, py_ref, sx_ref, sy_ref,
                            opx_ref, opy_ref, osx_ref, osy_ref):
    r = ratio_ref[0, 0]
    sx = sx_ref[...]
    sy = sy_ref[...]
    nsx = sx * r
    nsy = sy * r
    opx_ref[...] = px_ref[...] + 0.5 * (sx - nsx)
    opy_ref[...] = py_ref[...] + 0.5 * (sy - nsy)
    osx_ref[...] = nsx
    osy_ref[...] = nsy


def _pin_scale_kernel(ratio_ref, ox_ref, oy_ref, out_x_ref, out_y_ref):
    r = ratio_ref[...]
    out_x_ref[...] = ox_ref[...] * r
    out_y_ref[...] = oy_ref[...] * r


def _lane_dense_call(kernel, n, arrays, num_out, smem_scalar=None):
    """Run an elementwise kernel over n values, lane-dense (rows, 512) layout."""
    # TODO(synk): write directly into the destination slices of pos/node_size
    # via input_output_aliases + offset index_maps to drop the pad/reshape and
    # .at[].set round trips (Stage B is HBM-roofline bound but minor overall).
    lanes = _EW_LANES
    rows = _round_up(max(n, 1), lanes) // lanes
    if rows <= _EW_MAX_ROWS:
        rb, rows_pad = rows, rows
    else:
        rb = _EW_MAX_ROWS
        rows_pad = _round_up(rows, rb)
    npad = rows_pad * lanes

    def to2d(a):
        a = jnp.asarray(a, jnp.float32)[:n]
        return jnp.pad(a, (0, npad - n)).reshape(rows_pad, lanes)

    ins = [to2d(a) for a in arrays]
    spec = pl.BlockSpec((rb, lanes), lambda i: (i, 0))
    in_specs = [spec] * len(ins)
    if smem_scalar is not None:
        in_specs = [pl.BlockSpec(memory_space=pltpu.MemorySpace.SMEM)] + in_specs
        ins = [jnp.full((1, 1), float(smem_scalar), jnp.float32)] + ins

    outs = pl.pallas_call(
        kernel,
        out_shape=tuple(jax.ShapeDtypeStruct((rows_pad, lanes), jnp.float32)
                        for _ in range(num_out)),
        grid=(rows_pad // rb,),
        in_specs=in_specs,
        out_specs=tuple(spec for _ in range(num_out)),
        compiler_params=pltpu.CompilerParams(dimension_semantics=("parallel",)),
    )(*ins)
    if not isinstance(outs, (tuple, list)):
        outs = (outs,)
    return tuple(o.reshape(-1)[:n] for o in outs)


# ---------------------------------------------------------------------------
# AdjustNodeArea (JAX / Pallas)
# ---------------------------------------------------------------------------
FPInfo = namedtuple("FPInfo", ["routing_grid_xl", "routing_grid_yl",
                               "routing_grid_xh", "routing_grid_yh"])


class AdjustNodeArea:
    def __init__(self, flat_node2pin_map, flat_node2pin_start_map, pin_weights,
                 fp_info, num_movable_nodes, num_filler_nodes,
                 route_num_bins_x, route_num_bins_y, pin_num_bins_x, pin_num_bins_y,
                 total_place_area, total_whitespace_area, max_route_opt_adjust_rate,
                 route_opt_adjust_exponent=2.5, max_pin_opt_adjust_rate=2.5,
                 area_adjust_stop_ratio=0.01, route_area_adjust_stop_ratio=0.01,
                 pin_area_adjust_stop_ratio=0.05, unit_pin_capacity=0.0,
                 matmul_dtype=jnp.float32):
        # matmul_dtype defaults to f32: bf16 loses ~8 bits of mantissa and the
        # relu(opt_area - old_area) cancellation makes that visible for nodes
        # near the threshold (review correctness concern).  bf16 remains an
        # opt-in for very large bin grids.
        self.flat_node2pin_map = (None if flat_node2pin_map is None
                                  else np.asarray(flat_node2pin_map, np.int32))
        self.flat_node2pin_start_map = (None if flat_node2pin_start_map is None
                                        else np.asarray(flat_node2pin_start_map, np.int32))
        self.pin_weights = pin_weights
        self.fp_info = fp_info
        self.num_movable_nodes = int(num_movable_nodes)
        self.num_filler_nodes = int(num_filler_nodes)
        self.route_num_bins_x = int(route_num_bins_x)
        self.route_num_bins_y = int(route_num_bins_y)
        self.pin_num_bins_x = int(pin_num_bins_x)
        self.pin_num_bins_y = int(pin_num_bins_y)
        self.max_route_opt_adjust_rate = float(max_route_opt_adjust_rate)
        self.min_route_opt_adjust_rate = 1.0 / float(max_route_opt_adjust_rate)
        self.route_opt_adjust_exponent = float(route_opt_adjust_exponent)
        self.max_pin_opt_adjust_rate = float(max_pin_opt_adjust_rate)
        self.min_pin_opt_adjust_rate = 1.0 / float(max_pin_opt_adjust_rate)
        self.area_adjust_stop_ratio = float(area_adjust_stop_ratio)
        self.route_area_adjust_stop_ratio = float(route_area_adjust_stop_ratio)
        self.pin_area_adjust_stop_ratio = float(pin_area_adjust_stop_ratio)
        self.unit_pin_capacity = float(unit_pin_capacity)
        self.total_place_area = float(total_place_area)
        self.total_whitespace_area = float(total_whitespace_area)
        self.matmul_dtype = matmul_dtype

        # Precompute the static pin<->movable-node mapping once (host side).
        self._movable_pin_ids = None
        self._pin_entry_node = None
        if (self.flat_node2pin_map is not None
                and self.flat_node2pin_start_map is not None):
            start = self.flat_node2pin_start_map
            m = self.num_movable_nodes
            counts = start[1:m + 1] - start[:m]
            self._pin_entry_node = jnp.asarray(
                np.repeat(np.arange(m, dtype=np.int32), counts))
            self._movable_pin_ids = jnp.asarray(self.flat_node2pin_map[:int(start[m])])

    # -- fused node-area + statistics (Pallas) ------------------------------
    def _run_node_area_stats(self, pos_x, pos_y, node_size_x, node_size_y,
                             route_map, pin_map, matmul_dtype):
        m = self.num_movable_nodes
        fp = self.fp_info
        xl = float(fp.routing_grid_xl)
        yl = float(fp.routing_grid_yl)
        xh = float(fp.routing_grid_xh)
        yh = float(fp.routing_grid_yh)

        map_entries = []                       # (nbx, nby, util) in (route, pin) order
        if route_map is not None:
            map_entries.append((self.route_num_bins_x, self.route_num_bins_y, route_map))
        if pin_map is not None:
            map_entries.append((self.pin_num_bins_x, self.pin_num_bins_y, pin_map))
        assert map_entries
        n_maps = len(map_entries)

        def prep(u, nbx, nby):
            nbxp = _round_up(nbx, _BIN_ALIGN)
            nbyp = _round_up(nby, _BIN_ALIGN)
            u = jnp.asarray(u, jnp.float32).reshape(nbx, nby)
            u = jnp.pad(u, ((0, nbxp - nbx), (0, nbyp - nby)))   # zero pad -> exact
            return u, nbxp, nbyp

        groups = []            # (nbx_pad, nby_pad, bsx, bsy, stacked_map_count)
        util_arrays = []
        if n_maps == 2 and map_entries[0][:2] == map_entries[1][:2]:
            # Route & pin grids match: stack both maps along Bx -> ONE matmul/step.
            nbx, nby = map_entries[0][0], map_entries[0][1]
            u0, nbxp, nbyp = prep(map_entries[0][2], nbx, nby)
            u1, _, _ = prep(map_entries[1][2], nbx, nby)
            util_arrays.append(jnp.concatenate([u0, u1], axis=0).astype(matmul_dtype))
            groups.append((nbxp, nbyp, (xh - xl) / nbx, (yh - yl) / nby, 2))
        else:
            for nbx, nby, u in map_entries:
                up, nbxp, nbyp = prep(u, nbx, nby)
                util_arrays.append(up.astype(matmul_dtype))
                groups.append((nbxp, nbyp, (xh - xl) / nbx, (yh - yl) / nby, 1))

        # Generation-aware VMEM budget + explicit scoped limit.
        cap = _vmem_capacity_bytes()
        vmem_limit = int(min(cap * 0.75, 96 * 2 ** 20))
        map_bytes = 2 * sum(int(u.size) * u.dtype.itemsize for u in util_arrays)
        budget = max(vmem_limit - map_bytes - 6 * 2 ** 20, 2 ** 20)
        tn = _choose_node_tile(groups, m, budget, jnp.dtype(matmul_dtype).itemsize)

        npad = _round_up(max(m, 1), tn)
        steps = npad // tn
        rows_in = [_row(a, m, npad) for a in (pos_x, pos_y, node_size_x, node_size_y)]

        kernel = functools.partial(
            _node_area_stats_kernel,
            xl=xl, yl=yl, groups=tuple(groups), n_maps=n_maps,
            has_route=route_map is not None, has_pin=pin_map is not None,
            matmul_dtype=matmul_dtype)

        node_spec = pl.BlockSpec((1, tn), lambda i: (0, i))
        util_specs = [pl.BlockSpec(u.shape, lambda i: (0, 0)) for u in util_arrays]
        incr_spec = pl.BlockSpec((1, tn), lambda i: (0, i))
        sums_spec = pl.BlockSpec((1, 8, _LANE), lambda i: (i, 0, 0))

        incr2d, partial_sums = pl.pallas_call(
            kernel,
            out_shape=(jax.ShapeDtypeStruct((1, npad), jnp.float32),
                       jax.ShapeDtypeStruct((steps, 8, _LANE), jnp.float32)),
            grid=(steps,),
            in_specs=[node_spec] * 4 + util_specs,
            out_specs=(incr_spec, sums_spec),
            compiler_params=pltpu.CompilerParams(
                dimension_semantics=("parallel",),
                vmem_limit_bytes=vmem_limit),
        )(*rows_in, *util_arrays)

        sums = jnp.sum(partial_sums, axis=0)        # (8, 128)
        return incr2d[0, :m], sums

    # -- forward -------------------------------------------------------------
    def forward(self, pos, node_size_x, node_size_y, pin_offset_x, pin_offset_y,
                target_density, route_utilization_map, pin_utilization_map):
        M = self.num_movable_nodes
        F = self.num_filler_nodes
        adjust_route = route_utilization_map is not None
        adjust_pin = pin_utilization_map is not None
        if not (adjust_pin or adjust_route):
            return ((False, False, False), pos, node_size_x, node_size_y,
                    pin_offset_x, pin_offset_y, target_density)

        pos = jnp.asarray(pos, jnp.float32)
        node_size_x = jnp.asarray(node_size_x, jnp.float32)
        node_size_y = jnp.asarray(node_size_y, jnp.float32)
        pin_offset_x = jnp.asarray(pin_offset_x, jnp.float32)
        pin_offset_y = jnp.asarray(pin_offset_y, jnp.float32)

        num_nodes = pos.shape[0] // 2
        pos_x = pos[:num_nodes]
        pos_y = pos[num_nodes:]

        route_map = None
        pin_map = None
        if adjust_route:
            route_map = jnp.clip(
                jnp.asarray(route_utilization_map, jnp.float32)
                ** self.route_opt_adjust_exponent,
                self.min_route_opt_adjust_rate, self.max_route_opt_adjust_rate)
        if adjust_pin:
            pin_map = jnp.clip(jnp.asarray(pin_utilization_map, jnp.float32),
                               self.min_pin_opt_adjust_rate, self.max_pin_opt_adjust_rate)

        # ---- Stage A: fused node-area + statistics (one pallas_call) -------
        area_increment, sums = self._run_node_area_stats(
            pos_x, pos_y, node_size_x, node_size_y, route_map, pin_map,
            self.matmul_dtype)

        if F > 0:
            old_filler_area_sum_dev = jnp.sum(node_size_x[-F:] * node_size_y[-F:])
        else:
            old_filler_area_sum_dev = jnp.zeros((), jnp.float32)

        # ---- single device->host transfer for ALL scalar decisions ---------
        scal = np.asarray(jnp.concatenate(
            [sums[:4, 0], jnp.reshape(old_filler_area_sum_dev, (1,))]))
        old_movable_area_sum = float(scal[0])
        area_increment_sum = float(scal[1])
        route_incr_sum = float(scal[2])
        pin_incr_sum = float(scal[3])
        old_filler_area_sum = float(scal[4])

        head = min(0.1 * self.total_whitespace_area,
                   self.total_place_area - old_movable_area_sum)
        if area_increment_sum > 0.0:
            scale_factor = head / area_increment_sum
        else:
            scale_factor = math.inf if head > 0 else (-math.inf if head < 0 else 0.0)

        if scale_factor <= 0:
            scale_eff = 0.0
            area_increment_sum = 0.0
        elif scale_factor >= 1:
            scale_eff = 1.0
        else:
            scale_eff = scale_factor
            area_increment_sum *= scale_factor

        new_movable_area_sum = old_movable_area_sum + area_increment_sum
        area_increment_ratio = (area_increment_sum / old_movable_area_sum
                                if old_movable_area_sum > 0 else 0.0)

        if adjust_route:
            route_ratio = (route_incr_sum / old_movable_area_sum
                           if old_movable_area_sum > 0 else 0.0)
            adjust_route = route_ratio > self.route_area_adjust_stop_ratio
        if adjust_pin:
            pin_ratio_s = (pin_incr_sum / old_movable_area_sum
                           if old_movable_area_sum > 0 else 0.0)
            adjust_pin = pin_ratio_s > self.pin_area_adjust_stop_ratio

        adjust_area_flag = (area_increment_ratio > self.area_adjust_stop_ratio
                            and (adjust_route or adjust_pin))
        if not adjust_area_flag:
            return ((False, bool(adjust_route), bool(adjust_pin)),
                    pos, node_size_x, node_size_y, pin_offset_x, pin_offset_y,
                    target_density)

        # ---- Stage B: inflate movable nodes (lane-dense fused kernel) -------
        new_px_m, new_py_m, new_sx_m, new_sy_m, movable_ratio = _lane_dense_call(
            _inflate_movable_kernel, M,
            (pos_x[:M], pos_y[:M], node_size_x[:M], node_size_y[:M], area_increment),
            num_out=5, smem_scalar=scale_eff)

        pos_x = pos_x.at[:M].set(new_px_m)
        pos_y = pos_y.at[:M].set(new_py_m)
        node_size_x = node_size_x.at[:M].set(new_sx_m)
        node_size_y = node_size_y.at[:M].set(new_sy_m)

        # ---- inflate (shrink) filler nodes ----------------------------------
        if F > 0 and (new_movable_area_sum + old_filler_area_sum
                      > self.total_place_area):
            new_filler_area_sum = max(self.total_place_area - new_movable_area_sum, 0.0)
            filler_ratio = (math.sqrt(new_filler_area_sum / old_filler_area_sum)
                            if old_filler_area_sum > 0 else 1.0)
            new_px_f, new_py_f, new_sx_f, new_sy_f = _lane_dense_call(
                _inflate_uniform_kernel, F,
                (pos_x[-F:], pos_y[-F:], node_size_x[-F:], node_size_y[-F:]),
                num_out=4, smem_scalar=filler_ratio)
            pos_x = pos_x.at[-F:].set(new_px_f)
            pos_y = pos_y.at[-F:].set(new_py_f)
            node_size_x = node_size_x.at[-F:].set(new_sx_f)
            node_size_y = node_size_y.at[-F:].set(new_sy_f)
        else:
            new_filler_area_sum = old_filler_area_sum

        target_density = jnp.asarray(
            (new_movable_area_sum + new_filler_area_sum) / self.total_place_area,
            jnp.float32)

        # ---- update pin offsets ---------------------------------------------
        # TODO(synk): the irregular node->pin gather/scatter has no clean Pallas
        # equivalent; it is done with plain JAX indexed updates, while the dense
        # per-pin scaling runs in a fused two-output Pallas kernel.
        if self._movable_pin_ids is not None and pin_offset_x.shape[0] > 0:
            num_pins = pin_offset_x.shape[0]
            pin_ratio = jnp.ones((num_pins,), jnp.float32).at[self._movable_pin_ids].set(
                movable_ratio[self._pin_entry_node])
            pin_offset_x, pin_offset_y = _lane_dense_call(
                _pin_scale_kernel, num_pins,
                (pin_ratio, pin_offset_x, pin_offset_y), num_out=2)

        pos = jnp.concatenate([pos_x, pos_y])
        return ((True, bool(adjust_route), bool(adjust_pin)),
                pos, node_size_x, node_size_y, pin_offset_x, pin_offset_y,
                target_density)


# ---------------------------------------------------------------------------
# Reference (numpy port of the C++ adjust_node_area kernel) for sanity checking
# ---------------------------------------------------------------------------
def _node_area_ref(pos_x, pos_y, nsx, nsy, util, xl, yl, bsx, bsy, nbx, nby, m):
    out = np.zeros(m, np.float64)
    for i in range(m):
        x_min = float(pos_x[i]); x_max = x_min + float(nsx[i])
        y_min = float(pos_y[i]); y_max = y_min + float(nsy[i])
        bxl = max(int((x_min - xl) / bsx), 0)
        bxh = min(int((x_max - xl) / bsx) + 1, nbx)
        byl = max(int((y_min - yl) / bsy), 0)
        byh = min(int((y_max - yl) / bsy) + 1, nby)
        acc = 0.0
        for x in range(bxl, bxh):
            for y in range(byl, byh):
                ov = ((min(x_max, (x + 1) * bsx + xl) - max(x_min, x * bsx + xl)) *
                      (min(y_max, (y + 1) * bsy + yl) - max(y_min, y * bsy + yl)))
                acc += ov * float(util[x, y])
        out[i] = acc
    return out


if __name__ == "__main__":
    key = jax.random.PRNGKey(0)
    num_movable = 64
    num_fixed = 8
    num_filler = 32
    num_nodes = num_movable + num_fixed + num_filler
    route_bins = (16, 16)
    pin_bins = (16, 16)
    xl, yl, xh, yh = 0.0, 0.0, 32.0, 32.0

    ks = jax.random.split(key, 8)
    node_size_x = jax.random.uniform(ks[0], (num_nodes,), jnp.float32, 1.0, 3.0)
    node_size_y = jax.random.uniform(ks[1], (num_nodes,), jnp.float32, 1.0, 3.0)
    pos_x = jax.random.uniform(ks[2], (num_nodes,), jnp.float32, xl, xh - 3.0)
    pos_y = jax.random.uniform(ks[3], (num_nodes,), jnp.float32, yl, yh - 3.0)
    pos = jnp.concatenate([pos_x, pos_y])
    route_util = jax.random.uniform(ks[4], route_bins, jnp.float32, 0.5, 2.0)
    pin_util = jax.random.uniform(ks[5], pin_bins, jnp.float32, 0.5, 2.0)

    pins_per_node = 4
    num_pins = num_nodes * pins_per_node
    flat_node2pin_start_map = np.arange(num_nodes + 1, dtype=np.int32) * pins_per_node
    flat_node2pin_map = np.arange(num_pins, dtype=np.int32)
    pin_offset_x = jax.random.uniform(ks[6], (num_pins,), jnp.float32, 0.0, 1.0)
    pin_offset_y = jax.random.uniform(ks[7], (num_pins,), jnp.float32, 0.0, 1.0)

    fp_info = FPInfo(routing_grid_xl=xl, routing_grid_yl=yl,
                     routing_grid_xh=xh, routing_grid_yh=yh)
    target_density = jnp.asarray(0.9, jnp.float32)

    module = AdjustNodeArea(
        flat_node2pin_map=flat_node2pin_map,
        flat_node2pin_start_map=flat_node2pin_start_map,
        pin_weights=None,
        fp_info=fp_info,
        num_movable_nodes=num_movable,
        num_filler_nodes=num_filler,
        route_num_bins_x=route_bins[0], route_num_bins_y=route_bins[1],
        pin_num_bins_x=pin_bins[0], pin_num_bins_y=pin_bins[1],
        total_place_area=400.0,
        total_whitespace_area=200.0,
        max_route_opt_adjust_rate=2.0,
        route_opt_adjust_exponent=2.5,
        max_pin_opt_adjust_rate=2.5,
        unit_pin_capacity=1.0)

    # --- sanity check: fused stage-A kernel (f32 matmul) vs numpy reference ---
    rmap = jnp.clip(route_util ** 2.5, 1.0 / 2.0, 2.0)
    pmap = jnp.clip(pin_util, 1.0 / 2.5, 2.5)
    incr_dev, sums_dev = module._run_node_area_stats(
        pos_x, pos_y, node_size_x, node_size_y, rmap, pmap, jnp.float32)

    r_ref = _node_area_ref(np.asarray(pos_x), np.asarray(pos_y),
                           np.asarray(node_size_x), np.asarray(node_size_y),
                           np.asarray(rmap), xl, yl,
                           (xh - xl) / route_bins[0], (yh - yl) / route_bins[1],
                           route_bins[0], route_bins[1], num_movable)
    p_ref = _node_area_ref(np.asarray(pos_x), np.asarray(pos_y),
                           np.asarray(node_size_x), np.asarray(node_size_y),
                           np.asarray(pmap), xl, yl,
                           (xh - xl) / pin_bins[0], (yh - yl) / pin_bins[1],
                           pin_bins[0], pin_bins[1], num_movable)
    old_ref = (np.asarray(node_size_x[:num_movable], np.float64)
               * np.asarray(node_size_y[:num_movable], np.float64))
    incr_ref_np = np.maximum(np.maximum(r_ref, p_ref) - old_ref, 0.0)

    np.testing.assert_allclose(np.asarray(incr_dev), incr_ref_np,
                               rtol=1e-4, atol=1e-3)
    sums_np = np.asarray(sums_dev)
    np.testing.assert_allclose(sums_np[0, 0], old_ref.sum(), rtol=1e-4)
    np.testing.assert_allclose(sums_np[1, 0], incr_ref_np.sum(), rtol=1e-4, atol=1e-3)
    np.testing.assert_allclose(sums_np[2, 0], np.maximum(r_ref - old_ref, 0.0).sum(),
                               rtol=1e-4, atol=1e-3)
    np.testing.assert_allclose(sums_np[3, 0], np.maximum(p_ref - old_ref, 0.0).sum(),
                               rtol=1e-4, atol=1e-3)

    # --- full forward (f32 MXU path by default) ---
    (flags, new_pos, new_nsx, new_nsy,
     new_pin_off_x, new_pin_off_y, new_target_density) = module.forward(
        pos, node_size_x, node_size_y, pin_offset_x, pin_offset_y,
        target_density, route_util, pin_util)

    jax.block_until_ready((new_pos, new_nsx, new_nsy,
                           new_pin_off_x, new_pin_off_y, new_target_density))
    assert np.all(np.isfinite(np.asarray(new_pos)))
    assert np.all(np.isfinite(np.asarray(new_nsx)))
    assert np.all(np.isfinite(np.asarray(new_nsy)))
    assert np.all(np.isfinite(np.asarray(new_pin_off_x)))
    assert np.all(np.isfinite(np.asarray(new_pin_off_y)))
    print("KERNEL_OK")
</pallas_src>

<mosaic_0001>
module attributes {stable_mosaic.version = 11 : i64} {
  func.func @_node_area_stats_kernel(%arg0: i32, %arg1: memref<1x256xf32, #tpu.memory_space<vmem>>, %arg2: memref<1x256xf32, #tpu.memory_space<vmem>>, %arg3: memref<1x256xf32, #tpu.memory_space<vmem>>, %arg4: memref<1x256xf32, #tpu.memory_space<vmem>>, %arg5: memref<256x128xf32, #tpu.memory_space<vmem>>, %arg6: memref<1x256xf32, #tpu.memory_space<vmem>>, %arg7: memref<1x8x128xf32, #tpu.memory_space<vmem>>) attributes {dimension_semantics = [#tpu.dimension_semantics<parallel>], iteration_bounds = array<i64: 1>, scalar_prefetch = 0 : i64, scratch_operands = 0 : i64, tpu.core_type = #tpu.core_type<tc>, window_params = [{transform_indices = @transform_0, window_bounds = array<i64: 1, 256>}, {transform_indices = @transform_1, window_bounds = array<i64: 1, 256>}, {transform_indices = @transform_2, window_bounds = array<i64: 1, 256>}, {transform_indices = @transform_3, window_bounds = array<i64: 1, 256>}, {pipeline_mode = #tpu.pipeline_mode<synchronous>, transform_indices = @transform_4, window_bounds = array<i64: 256, 128>}, {transform_indices = @transform_5, window_bounds = array<i64: 1, 256>}, {transform_indices = @transform_6, window_bounds = array<i64: 1, 8, 128>}]} {
    %c0 = arith.constant 0 : index
    %c0_0 = arith.constant 0 : index
    %0 = vector.load %arg1[%c0, %c0_0] : memref<1x256xf32, #tpu.memory_space<vmem>>, vector<1x256xf32>
    %c0_1 = arith.constant 0 : index
    %c0_2 = arith.constant 0 : index
    %1 = vector.load %arg2[%c0_1, %c0_2] : memref<1x256xf32, #tpu.memory_space<vmem>>, vector<1x256xf32>
    %c0_3 = arith.constant 0 : index
    %c0_4 = arith.constant 0 : index
    %2 = vector.load %arg3[%c0_3, %c0_4] : memref<1x256xf32, #tpu.memory_space<vmem>>, vector<1x256xf32>
    %c0_5 = arith.constant 0 : index
    %c0_6 = arith.constant 0 : index
    %3 = vector.load %arg4[%c0_5, %c0_6] : memref<1x256xf32, #tpu.memory_space<vmem>>, vector<1x256xf32>
    %4 = arith.addf %0, %2 : vector<1x256xf32>
    %5 = arith.addf %1, %3 : vector<1x256xf32>
    %6 = arith.mulf %2, %3 : vector<1x256xf32>
    %7 = tpu.iota {dimensions = array<i32: 0>} : vector<128x1xi32>
    %8 = arith.sitofp %7 : vector<128x1xi32> to vector<128x1xf32>
    %cst = arith.constant 2.000000e+00 : f32
    %9 = vector.broadcast %cst : f32 to vector<128x1xf32>
    %10 = arith.mulf %8, %9 : vector<128x1xf32>
    %cst_7 = arith.constant 0.000000e+00 : f32
    %11 = vector.broadcast %cst_7 : f32 to vector<128x1xf32>
    %12 = arith.addf %10, %11 : vector<128x1xf32>
    %13 = tpu.iota {dimensions = array<i32: 0>} : vector<128x1xi32>
    %14 = arith.sitofp %13 : vector<128x1xi32> to vector<128x1xf32>
    %cst_8 = arith.constant 2.000000e+00 : f32
    %15 = vector.broadcast %cst_8 : f32 to vector<128x1xf32>
    %16 = arith.mulf %14, %15 : vector<128x1xf32>
    %cst_9 = arith.constant 0.000000e+00 : f32
    %17 = vector.broadcast %cst_9 : f32 to vector<128x1xf32>
    %18 = arith.addf %16, %17 : vector<128x1xf32>
    %cst_10 = arith.constant 2.000000e+00 : f32
    %19 = vector.broadcast %cst_10 : f32 to vector<128x1xf32>
    %20 = arith.addf %12, %19 : vector<128x1xf32>
    %21 = vector.broadcast %4 : vector<1x256xf32> to vector<128x256xf32>
    %22 = vector.broadcast %20 : vector<128x1xf32> to vector<128x256xf32>
    %23 = arith.minimumf %21, %22 : vector<128x256xf32>
    %24 = vector.broadcast %0 : vector<1x256xf32> to vector<128x256xf32>
    %25 = vector.broadcast %12 : vector<128x1xf32> to vector<128x256xf32>
    %26 = arith.maximumf %24, %25 : vector<128x256xf32>
    %27 = arith.subf %23, %26 : vector<128x256xf32>
    %cst_11 = arith.constant 0.000000e+00 : f32
    %28 = vector.broadcast %cst_11 : f32 to vector<128x256xf32>
    %29 = arith.maximumf %27, %28 : vector<128x256xf32>
    %cst_12 = arith.constant 2.000000e+00 : f32
    %30 = vector.broadcast %cst_12 : f32 to vector<128x1xf32>
    %31 = arith.addf %18, %30 : vector<128x1xf32>
    %32 = vector.broadcast %5 : vector<1x256xf32> to vector<128x256xf32>
    %33 = vector.broadcast %31 : vector<128x1xf32> to vector<128x256xf32>
    %34 = arith.minimumf %32, %33 : vector<128x256xf32>
    %35 = vector.broadcast %1 : vector<1x256xf32> to vector<128x256xf32>
    %36 = vector.broadcast %18 : vector<128x1xf32> to vector<128x256xf32>
    %37 = arith.maximumf %35, %36 : vector<128x256xf32>
    %38 = arith.subf %34, %37 : vector<128x256xf32>
    %cst_13 = arith.constant 0.000000e+00 : f32
    %39 = vector.broadcast %cst_13 : f32 to vector<128x256xf32>
    %40 = arith.maximumf %38, %39 : vector<128x256xf32>
    %c0_14 = arith.constant 0 : index
    %c0_15 = arith.constant 0 : index
    %41 = vector.load %arg5[%c0_14, %c0_15] : memref<256x128xf32, #tpu.memory_space<vmem>>, vector<256x128xf32>
    %cst_16 = arith.constant dense<0.000000e+00> : vector<256x256xf32>
    %42 = tpu.matmul %41, %40, %cst_16 {dimension_numbers = #tpu.dot_dimension_numbers<[1], [0], [0], [1], [0, 0, 1, 1], [], []>} : vector<256x128xf32>, vector<128x256xf32>, vector<256x256xf32> -> vector<256x256xf32>
    %43 = vector.extract_strided_slice %42 {offsets = [0, 0], sizes = [128, 256], strides = [1, 1]} : vector<256x256xf32> to vector<128x256xf32>
    %44 = arith.mulf %29, %43 : vector<128x256xf32>
    %cst_17 = arith.constant dense<0.000000e+00> : vector<256xf32>
    %45 = vector.multi_reduction <add>, %44, %cst_17 [0] : vector<128x256xf32> to vector<256xf32>
    %46 = vector.shape_cast %45 : vector<256xf32> to vector<1x256xf32>
    %47 = vector.extract_strided_slice %42 {offsets = [128, 0], sizes = [128, 256], strides = [1, 1]} : vector<256x256xf32> to vector<128x256xf32>
    %48 = arith.mulf %29, %47 : vector<128x256xf32>
    %cst_18 = arith.constant dense<0.000000e+00> : vector<256xf32>
    %49 = vector.multi_reduction <add>, %48, %cst_18 [0] : vector<128x256xf32> to vector<256xf32>
    %50 = vector.shape_cast %49 : vector<256xf32> to vector<1x256xf32>
    %51 = arith.maximumf %46, %50 : vector<1x256xf32>
    %52 = arith.subf %51, %6 : vector<1x256xf32>
    %cst_19 = arith.constant 0.000000e+00 : f32
    %53 = vector.broadcast %cst_19 : f32 to vector<1x256xf32>
    %54 = arith.maximumf %52, %53 : vector<1x256xf32>
    %c0_20 = arith.constant 0 : index
    %c0_21 = arith.constant 0 : index
    %55 = vector.load %arg6[%c0_20, %c0_21] : memref<1x256xf32, #tpu.memory_space<vmem>>, vector<1x256xf32>
    tpu.vector_store %arg6[%c0_20, %c0_21], %54 {strides = array<i32>} : memref<1x256xf32, #tpu.memory_space<vmem>>, vector<1x256xf32>,
    %56 = tpu.iota {dimensions = array<i32: 1>} : vector<1x8x128xi32>
    %c0_i32 = arith.constant 0 : i32
    %57 = vector.broadcast %c0_i32 : i32 to vector<1x8x128xi32>
    %58 = arith.cmpi eq, %56, %57 : vector<1x8x128xi32>
    %59 = vector.shape_cast %6 : vector<1x256xf32> to vector<1x1x256xf32>
    %cst_22 = arith.constant dense<0.000000e+00> : vector<1xf32>
    %60 = vector.multi_reduction <add>, %59, %cst_22 [1, 2] : vector<1x1x256xf32> to vector<1xf32>
    %61 = vector.shape_cast %60 : vector<1xf32> to vector<1x1x1xf32>
    %62 = vector.extract %61[0, 0, 0] : f32 from vector<1x1x1xf32>
    %cst_23 = arith.constant 0.000000e+00 : f32
    %63 = vector.broadcast %62 : f32 to vector<1x8x128xf32>
    %64 = vector.broadcast %cst_23 : f32 to vector<1x8x128xf32>
    %65 = arith.select %58, %63, %64 : vector<1x8x128xi1>, vector<1x8x128xf32>
    %c1_i32 = arith.constant 1 : i32
    %66 = vector.broadcast %c1_i32 : i32 to vector<1x8x128xi32>
    %67 = arith.cmpi eq, %56, %66 : vector<1x8x128xi32>
    %68 = vector.shape_cast %54 : vector<1x256xf32> to vector<1x1x256xf32>
    %cst_24 = arith.constant dense<0.000000e+00> : vector<1xf32>
    %69 = vector.multi_reduction <add>, %68, %cst_24 [1, 2] : vector<1x1x256xf32> to vector<1xf32>
    %70 = vector.shape_cast %69 : vector<1xf32> to vector<1x1x1xf32>
    %71 = vector.extract %70[0, 0, 0] : f32 from vector<1x1x1xf32>
    %cst_25 = arith.constant 0.000000e+00 : f32
    %72 = vector.broadcast %71 : f32 to vector<1x8x128xf32>
    %73 = vector.broadcast %cst_25 : f32 to vector<1x8x128xf32>
    %74 = arith.select %67, %72, %73 : vector<1x8x128xi1>, vector<1x8x128xf32>
    %75 = arith.addf %65, %74 : vector<1x8x128xf32>
    %c2_i32 = arith.constant 2 : i32
    %76 = vector.broadcast %c2_i32 : i32 to vector<1x8x128xi32>
    %77 = arith.cmpi eq, %56, %76 : vector<1x8x128xi32>
    %78 = arith.subf %46, %6 : vector<1x256xf32>
    %cst_26 = arith.constant 0.000000e+00 : f32
    %79 = vector.broadcast %cst_26 : f32 to vector<1x256xf32>
    %80 = arith.maximumf %78, %79 : vector<1x256xf32>
    %81 = vector.shape_cast %80 : vector<1x256xf32> to vector<1x1x256xf32>
    %cst_27 = arith.constant dense<0.000000e+00> : vector<1xf32>
    %82 = vector.multi_reduction <add>, %81, %cst_27 [1, 2] : vector<1x1x256xf32> to vector<1xf32>
    %83 = vector.shape_cast %82 : vector<1xf32> to vector<1x1x1xf32>
    %84 = vector.extract %83[0, 0, 0] : f32 from vector<1x1x1xf32>
    %cst_28 = arith.constant 0.000000e+00 : f32
    %85 = vector.broadcast %84 : f32 to vector<1x8x128xf32>
    %86 = vector.broadcast %cst_28 : f32 to vector<1x8x128xf32>
    %87 = arith.select %77, %85, %86 : vector<1x8x128xi1>, vector<1x8x128xf32>
    %88 = arith.addf %75, %87 : vector<1x8x128xf32>
    %c3_i32 = arith.constant 3 : i32
    %89 = vector.broadcast %c3_i32 : i32 to vector<1x8x128xi32>
    %90 = arith.cmpi eq, %56, %89 : vector<1x8x128xi32>
    %91 = arith.subf %50, %6 : vector<1x256xf32>
    %cst_29 = arith.constant 0.000000e+00 : f32
    %92 = vector.broadcast %cst_29 : f32 to vector<1x256xf32>
    %93 = arith.maximumf %91, %92 : vector<1x256xf32>
    %94 = vector.shape_cast %93 : vector<1x256xf32> to vector<1x1x256xf32>
    %cst_30 = arith.constant dense<0.000000e+00> : vector<1xf32>
    %95 = vector.multi_reduction <add>, %94, %cst_30 [1, 2] : vector<1x1x256xf32> to vector<1xf32>
    %96 = vector.shape_cast %95 : vector<1xf32> to vector<1x1x1xf32>
    %97 = vector.extract %96[0, 0, 0] : f32 from vector<1x1x1xf32>
    %cst_31 = arith.constant 0.000000e+00 : f32
    %98 = vector.broadcast %97 : f32 to vector<1x8x128xf32>
    %99 = vector.broadcast %cst_31 : f32 to vector<1x8x128xf32>
    %100 = arith.select %90, %98, %99 : vector<1x8x128xi1>, vector<1x8x128xf32>
    %101 = arith.addf %88, %100 : vector<1x8x128xf32>
    %c0_32 = arith.constant 0 : index
    %c0_33 = arith.constant 0 : index
    %c0_34 = arith.constant 0 : index
    %102 = vector.load %arg7[%c0_32, %c0_33, %c0_34] : memref<1x8x128xf32, #tpu.memory_space<vmem>>, vector<1x8x128xf32>
    tpu.vector_store %arg7[%c0_32, %c0_33, %c0_34], %101 {strides = array<i32>} : memref<1x8x128xf32, #tpu.memory_space<vmem>>, vector<1x8x128xf32>,
    return
  }
  func.func @transform_0(%arg0: i32) -> (i32, i32) {
    %c0_i32 = arith.constant 0 : i32
    %c0_i32_0 = arith.constant 0 : i32
    return %c0_i32, %arg0 : i32, i32
  }
  func.func @transform_1(%arg0: i32) -> (i32, i32) {
    %c0_i32 = arith.constant 0 : i32
    %c0_i32_0 = arith.constant 0 : i32
    return %c0_i32, %arg0 : i32, i32
  }
  func.func @transform_2(%arg0: i32) -> (i32, i32) {
    %c0_i32 = arith.constant 0 : i32
    %c0_i32_0 = arith.constant 0 : i32
    return %c0_i32, %arg0 : i32, i32
  }
  func.func @transform_3(%arg0: i32) -> (i32, i32) {
    %c0_i32 = arith.constant 0 : i32
    %c0_i32_0 = arith.constant 0 : i32
    return %c0_i32, %arg0 : i32, i32
  }
  func.func @transform_4(%arg0: i32) -> (i32, i32) {
    %c0_i32 = arith.constant 0 : i32
    %c0_i32_0 = arith.constant 0 : i32
    %c0_i32_1 = arith.constant 0 : i32
    return %c0_i32, %c0_i32_0 : i32, i32
  }
  func.func @transform_5(%arg0: i32) -> (i32, i32) {
    %c0_i32 = arith.constant 0 : i32
    %c0_i32_0 = arith.constant 0 : i32
    return %c0_i32, %arg0 : i32, i32
  }
  func.func @transform_6(%arg0: i32) -> (i32, i32, i32) {
    %c0_i32 = arith.constant 0 : i32
    %c0_i32_0 = arith.constant 0 : i32
    %c0_i32_1 = arith.constant 0 : i32
    return %arg0, %c0_i32, %c0_i32_0 : i32, i32, i32
  }
}

</mosaic_0001>

<llo_original>
// kernel: tpu_custom_call.1
$region0: #{tpu_custom_call.1}
  #allocation0 [shape = 'u32[]', space=smem, size = 0x4, offset = 0x4, fixed_abs, tag = 'smem constant byte address 0x4 - core index']
  #allocation1 [shape = 'u32[72,128]{1,0:T(1,128)}', space=vmem, size = 0x9000, scoped, tag = 'internal scratch']
  %s0 = inlined_call_operand.hbm [shape: f32[1,256], index: 0, kind: input, shape index: {}]
  %s1 = inlined_call_operand.hbm [shape: f32[1,256], index: 1, kind: input, shape index: {}]
  %s2 = inlined_call_operand.hbm [shape: f32[1,256], index: 2, kind: input, shape index: {}]
  %s3 = inlined_call_operand.vmem [shape: f32[1,256], index: 3, kind: input, shape index: {}]
  %s4 = inlined_call_operand.hbm [shape: f32[256,128], index: 4, kind: input, shape index: {}]
  %s5 = inlined_call_operand.hbm [shape: f32[1,256], index: 5, kind: output, shape index: {0}]
  %s6 = inlined_call_operand.hbm [shape: f32[1,8,128], index: 6, kind: output, shape index: {1}]
  %7 = xla_tuple %s5, %s6
  %s8 = sld [smem:[#allocation0]]
  $region54: #{tpu_custom_call.1} parent=0
    _
  %s10 = ssub.s32 1, %s8
  %s11 = scalar_select 0, %s10, %s8
  $region1: #{tpu_custom_call.1} parent=0
    #allocation2 [shape = 'u8[1024]{0}', space=vmem, size = 0x400, scoped, tag = 'input window, operand 0, single buffered']
    #allocation3 [shape = 's32[1]{0}', space=sflag, size = 0x4, scoped, tag = 'scoped memory for tpu_custom_call.1']
    #allocation4 [shape = 's32[1]{0}', space=sflag, size = 0x4, scoped, tag = 'scoped memory for tpu_custom_call.1']
    #allocation5 [shape = 'u8[1024]{0}', space=vmem, size = 0x400, scoped, tag = 'input window, operand 1, single buffered']
    #allocation6 [shape = 's32[1]{0}', space=sflag, size = 0x4, scoped, tag = 'scoped memory for tpu_custom_call.1']
    #allocation7 [shape = 'u8[1024]{0}', space=vmem, size = 0x400, scoped, tag = 'input window, operand 2, single buffered']
    #allocation8 [shape = 'u8[131072]{0}', space=vmem, size = 0x20000, scoped, tag = 'input window, operand 4, single buffered']
    #allocation9 [shape = 's32[1]{0}', space=sflag, size = 0x4, scoped, tag = 'scoped memory for tpu_custom_call.1']
    #allocation10 [shape = 'u8[1024]{0}', space=vmem, size = 0x400, scoped, tag = 'output window, operand 0, single buffered']
    #allocation11 [shape = 'u8[4096]{0}', space=vmem, size = 0x1000, scoped, tag = 'output window, operand 1, single buffered']
    #allocation12 [shape = 's32[1]{0}', space=sflag, size = 0x4, scoped, tag = 'scoped memory for tpu_custom_call.1']
    %12 = vsyncpa [#allocation3], 0
    %13 = vsyncpa [#allocation6], 0
    %14 = vsyncpa [#allocation9], 0
    %15 = vsyncpa [#allocation4], 0
    %16 = vsyncpa [#allocation12], 0
    // Predicated region
    $region2: #{tpu_custom_call.1} parent=1 // pred_check
      _
    $region3: #{tpu_custom_call.1} parent=1 // pred_check_branch
      %18 = sbr.rel (0) target = $region5
    $region4: #{tpu_custom_call.1} parent=1 // pred_region
      %20 = vsyncadd [#allocation3], 0
      %s22 = sshll.u32 %s0, 4
      %s23 = int_to_ptr.hbm [resolvable:$true] %s22
      %s24 = sshll.u32 [#allocation2], 4
      %s25 = int_to_ptr.vmem [resolvable:$true] %s24
      %27 = dma.hbm_to_vmem [thread:$0]  %s23, 32, %s25, [#allocation3]
    $region5: #{tpu_custom_call.1} parent=1 // pred_fallthru
      _
    // Predicated region
    $region6: #{tpu_custom_call.1} parent=1 // pred_check
      _
    $region7: #{tpu_custom_call.1} parent=1 // pred_check_branch
      %29 = sbr.rel (0) target = $region9
    $region8: #{tpu_custom_call.1} parent=1 // pred_region
      %31 = vsyncadd [#allocation6], 0
      %s33 = sshll.u32 %s1, 4
      %s34 = int_to_ptr.hbm [resolvable:$true] %s33
      %s35 = sshll.u32 [#allocation5], 4
      %s36 = int_to_ptr.vmem [resolvable:$true] %s35
      %38 = dma.hbm_to_vmem [thread:$0]  %s34, 32, %s36, [#allocation6]
    $region9: #{tpu_custom_call.1} parent=1 // pred_fallthru
      _
    // Predicated region
    $region10: #{tpu_custom_call.1} parent=1 // pred_check
      _
    $region11: #{tpu_custom_call.1} parent=1 // pred_check_branch
      %40 = sbr.rel (0) target = $region13
    $region12: #{tpu_custom_call.1} parent=1 // pred_region
      %42 = vsyncadd [#allocation6], 0
      %s44 = sshll.u32 %s2, 4
      %s45 = int_to_ptr.hbm [resolvable:$true] %s44
      %s46 = sshll.u32 [#allocation7], 4
      %s47 = int_to_ptr.vmem [resolvable:$true] %s46
      %49 = dma.hbm_to_vmem [thread:$0]  %s45, 32, %s47, [#allocation6]
    $region13: #{tpu_custom_call.1} parent=1 // pred_fallthru
      _
    // Predicated region
    $region14: #{tpu_custom_call.1} parent=1 // pred_check
      _
    $region15: #{tpu_custom_call.1} parent=1 // pred_check_branch
      %51 = sbr.rel (0) target = $region17
    $region16: #{tpu_custom_call.1} parent=1 // pred_region
      _
    $region17: #{tpu_custom_call.1} parent=1 // pred_fallthru
      _
    // Predicated region
    $region18: #{tpu_custom_call.1} parent=1 // pred_check
      _
    $region19: #{tpu_custom_call.1} parent=1 // pred_check_branch
      %53 = sbr.rel (0) target = $region21
    $region20: #{tpu_custom_call.1} parent=1 // pred_region
      %55 = vsyncadd [#allocation9], 0
      %s56 = sshll.u32 %s4, 4
      %s57 = int_to_ptr.hbm [resolvable:$true] %s56
      %s58 = sshll.u32 [#allocation8], 4
      %s59 = int_to_ptr.vmem [resolvable:$true] %s58
      %64 = dma.hbm_to_vmem [thread:$0]  %s57, 4096, %s59, [#allocation9], 128, 128, 8
    $region21: #{tpu_custom_call.1} parent=1 // pred_fallthru
      _
    // Predicated region
    $region22: #{tpu_custom_call.1} parent=1 // pred_check
      _
    $region23: #{tpu_custom_call.1} parent=1 // pred_check_branch
      %66 = sbr.rel (0) target = $region25
    $region24: #{tpu_custom_call.1} parent=1 // pred_region
      %68 = dma.done [#allocation3], 32
    $region25: #{tpu_custom_call.1} parent=1 // pred_fallthru
      _
    // Predicated region
    $region26: #{tpu_custom_call.1} parent=1 // pred_check
      _
    $region27: #{tpu_custom_call.1} parent=1 // pred_check_branch
      %70 = sbr.rel (0) target = $region29
    $region28: #{tpu_custom_call.1} parent=1 // pred_region
      %72 = dma.done [#allocation6], 32
    $region29: #{tpu_custom_call.1} parent=1 // pred_fallthru
      _
    // Predicated region
    $region30: #{tpu_custom_call.1} parent=1 // pred_check
      _
    $region31: #{tpu_custom_call.1} parent=1 // pred_check_branch
      %74 = sbr.rel (0) target = $region33
    $region32: #{tpu_custom_call.1} parent=1 // pred_region
      %76 = dma.done [#allocation6], 32
    $region33: #{tpu_custom_call.1} parent=1 // pred_fallthru
      _
    // Predicated region
    $region34: #{tpu_custom_call.1} parent=1 // pred_check
      _
    $region35: #{tpu_custom_call.1} parent=1 // pred_check_branch
      %78 = sbr.rel (0) target = $region37
    $region36: #{tpu_custom_call.1} parent=1 // pred_region
      %80 = dma.done [#allocation9], 4096
    $region37: #{tpu_custom_call.1} parent=1 // pred_fallthru
      _
    %v81 = vld [vmem:[#allocation2] sm:$0x3]
    %v82 = vld [vmem:[#allocation5] sm:$0x3]
    %v83 = vld [vmem:[#allocation7] sm:$0x3]
    %v84 = vld [vmem:[%s3] sm:$0x3]
    %v85 = vadd.f32 %v81, %v83
    %v86 = vadd.f32 %v82, %v84
    %v87 = vmul.f32 %v83, %v84
    %v88 = vlaneseq
    %v89 = vshrl.u32 %v88, 7
    %v90 = vadd.s32 %v89, 8
    %v91 = vadd.s32 %v89, 16
    %v92 = vadd.s32 %v89, 24
    %v93 = vadd.s32 %v89, 32
    %v94 = vadd.s32 %v89, 40
    %v95 = vadd.s32 %v89, 48
    %v96 = vadd.s32 %v89, 56
    %v97 = vadd.s32 %v89, 64
    %v98 = vadd.s32 %v89, 72
    %v99 = vadd.s32 %v89, 80
    %v100 = vadd.s32 %v89, 88
    %v101 = vadd.s32 %v89, 96
    %v102 = vadd.s32 %v89, 104
    %v103 = vadd.s32 %v89, 112
    %v104 = vadd.s32 %v89, 120
    %v105 = vcvt.s32.f32 %v89
    %v106 = vcvt.s32.f32 %v90
    %v107 = vcvt.s32.f32 %v91
    %v108 = vcvt.s32.f32 %v92
    %v109 = vcvt.s32.f32 %v93
    %v110 = vcvt.s32.f32 %v94
    %v111 = vcvt.s32.f32 %v95
    %v112 = vcvt.s32.f32 %v96
    %v113 = vcvt.s32.f32 %v97
    %v114 = vcvt.s32.f32 %v98
    %v115 = vcvt.s32.f32 %v99
    %v116 = vcvt.s32.f32 %v100
    %v117 = vcvt.s32.f32 %v101
    %v118 = vcvt.s32.f32 %v102
    %v119 = vcvt.s32.f32 %v103
    %v120 = vcvt.s32.f32 %v104
    %v121 = vmul.f32 %v105, 2.0
    %v122 = vmul.f32 %v106, 2.0
    %v123 = vmul.f32 %v107, 2.0
    %v124 = vmul.f32 %v108, 2.0
    %v125 = vmul.f32 %v109, 2.0
    %v126 = vmul.f32 %v110, 2.0
    %v127 = vmul.f32 %v111, 2.0
    %v128 = vmul.f32 %v112, 2.0
    %v129 = vmul.f32 %v113, 2.0
    %v130 = vmul.f32 %v114, 2.0
    %v131 = vmul.f32 %v115, 2.0
    %v132 = vmul.f32 %v116, 2.0
    %v133 = vmul.f32 %v117, 2.0
    %v134 = vmul.f32 %v118, 2.0
    %v135 = vmul.f32 %v119, 2.0
    %v136 = vmul.f32 %v120, 2.0
    %v137 = vadd.f32 %v121, 0.0
    %v138 = vadd.f32 %v122, 0.0
    %v139 = vadd.f32 %v123, 0.0
    %v140 = vadd.f32 %v124, 0.0
    %v141 = vadd.f32 %v125, 0.0
    %v142 = vadd.f32 %v126, 0.0
    %v143 = vadd.f32 %v127, 0.0
    %v144 = vadd.f32 %v128, 0.0
    %v145 = vadd.f32 %v129, 0.0
    %v146 = vadd.f32 %v130, 0.0
    %v147 = vadd.f32 %v131, 0.0
    %v148 = vadd.f32 %v132, 0.0
    %v149 = vadd.f32 %v133, 0.0
    %v150 = vadd.f32 %v134, 0.0
    %v151 = vadd.f32 %v135, 0.0
    %v152 = vadd.f32 %v136, 0.0
    %v153 = vadd.f32 %v137, 2.0
    %v154 = vadd.f32 %v138, 2.0
    %v155 = vadd.f32 %v139, 2.0
    %v156 = vadd.f32 %v140, 2.0
    %v157 = vadd.f32 %v141, 2.0
    %v158 = vadd.f32 %v142, 2.0
    %v159 = vadd.f32 %v143, 2.0
    %v160 = vadd.f32 %v144, 2.0
    %v161 = vadd.f32 %v145, 2.0
    %v162 = vadd.f32 %v146, 2.0
    %v163 = vadd.f32 %v147, 2.0
    %v164 = vadd.f32 %v148, 2.0
    %v165 = vadd.f32 %v149, 2.0
    %v166 = vadd.f32 %v150, 2.0
    %v167 = vadd.f32 %v151, 2.0
    %v168 = vadd.f32 %v152, 2.0
    %v170 = vperm.slane %v85, 0
    %v171 = vperm.slane %v85, 1
    %v174 = vmin.f32 %v170, %v153
    %v175 = vmin.f32 %v171, %v153
    %v176 = vmin.f32 %v170, %v154
    %v177 = vmin.f32 %v171, %v154
    %v178 = vmin.f32 %v170, %v155
    %v179 = vmin.f32 %v171, %v155
    %v180 = vmin.f32 %v170, %v156
    %v181 = vmin.f32 %v171, %v156
    %v182 = vmin.f32 %v170, %v157
    %v183 = vmin.f32 %v171, %v157
    %v184 = vmin.f32 %v170, %v158
    %v185 = vmin.f32 %v171, %v158
    %v186 = vmin.f32 %v170, %v159
    %v187 = vmin.f32 %v171, %v159
    %v188 = vmin.f32 %v170, %v160
    %v189 = vmin.f32 %v171, %v160
    %v190 = vmin.f32 %v170, %v161
    %v191 = vmin.f32 %v171, %v161
    %v192 = vmin.f32 %v170, %v162
    %v193 = vmin.f32 %v171, %v162
    %v194 = vmin.f32 %v170, %v163
    %v195 = vmin.f32 %v171, %v163
    %v196 = vmin.f32 %v170, %v164
    %v197 = vmin.f32 %v171, %v164
    %v198 = vmin.f32 %v170, %v165
    %v199 = vmin.f32 %v171, %v165
    %v200 = vmin.f32 %v170, %v166
    %v201 = vmin.f32 %v171, %v166
    %v202 = vmin.f32 %v170, %v167
    %v203 = vmin.f32 %v171, %v167
    %v204 = vmin.f32 %v170, %v168
    %v205 = vmin.f32 %v171, %v168
    %v207 = vperm.slane %v81, 0
    %v208 = vperm.slane %v81, 1
    %v211 = vmax.f32 %v207, %v137
    %v212 = vmax.f32 %v208, %v137
    %v213 = vmax.f32 %v207, %v138
    %v214 = vmax.f32 %v208, %v138
    %v215 = vmax.f32 %v207, %v139
    %v216 = vmax.f32 %v208, %v139
    %v217 = vmax.f32 %v207, %v140
    %v218 = vmax.f32 %v208, %v140
    %v219 = vmax.f32 %v207, %v141
    %v220 = vmax.f32 %v208, %v141
    %v221 = vmax.f32 %v207, %v142
    %v222 = vmax.f32 %v208, %v142
    %v223 = vmax.f32 %v207, %v143
    %v224 = vmax.f32 %v208, %v143
    %v225 = vmax.f32 %v207, %v144
    %v226 = vmax.f32 %v208, %v144
    %v227 = vmax.f32 %v207, %v145
    %v228 = vmax.f32 %v208, %v145
    %v229 = vmax.f32 %v207, %v146
    %v230 = vmax.f32 %v208, %v146
    %v231 = vmax.f32 %v207, %v147
    %v232 = vmax.f32 %v208, %v147
    %v233 = vmax.f32 %v207, %v148
    %v234 = vmax.f32 %v208, %v148
    %v235 = vmax.f32 %v207, %v149
    %v236 = vmax.f32 %v208, %v149
    %v237 = vmax.f32 %v207, %v150
    %v238 = vmax.f32 %v208, %v150
    %v239 = vmax.f32 %v207, %v151
    %v240 = vmax.f32 %v208, %v151
    %v241 = vmax.f32 %v207, %v152
    %v242 = vmax.f32 %v208, %v152
    %v243 = vsub.f32 %v174, %v211
    %v244 = vsub.f32 %v175, %v212
    %v245 = vsub.f32 %v176, %v213
    %v246 = vsub.f32 %v177, %v214
    %v247 = vsub.f32 %v178, %v215
    %v248 = vsub.f32 %v179, %v216
    %v249 = vsub.f32 %v180, %v217
    %v250 = vsub.f32 %v181, %v218
    %v251 = vsub.f32 %v182, %v219
    %v252 = vsub.f32 %v183, %v220
    %v253 = vsub.f32 %v184, %v221
    %v254 = vsub.f32 %v185, %v222
    %v255 = vsub.f32 %v186, %v223
    %v256 = vsub.f32 %v187, %v224
    %v257 = vsub.f32 %v188, %v225
    %v258 = vsub.f32 %v189, %v226
    %v259 = vsub.f32 %v190, %v227
    %v260 = vsub.f32 %v191, %v228
    %v261 = vsub.f32 %v192, %v229
    %v262 = vsub.f32 %v193, %v230
    %v263 = vsub.f32 %v194, %v231
    %v264 = vsub.f32 %v195, %v232
    %v265 = vsub.f32 %v196, %v233
    %v266 = vsub.f32 %v197, %v234
    %v267 = vsub.f32 %v198, %v235
    %v268 = vsub.f32 %v199, %v236
    %v269 = vsub.f32 %v200, %v237
    %v270 = vsub.f32 %v201, %v238
    %v271 = vsub.f32 %v202, %v239
    %v272 = vsub.f32 %v203, %v240
    %v273 = vsub.f32 %v204, %v241
    %v274 = vsub.f32 %v205, %v242
    %v275 = vmax.f32 %v243, 0.0
    %v276 = vmax.f32 %v244, 0.0
    %v277 = vmax.f32 %v245, 0.0
    %v278 = vmax.f32 %v246, 0.0
    %v279 = vmax.f32 %v247, 0.0
    %v280 = vmax.f32 %v248, 0.0
    %v281 = vmax.f32 %v249, 0.0
    %v282 = vmax.f32 %v250, 0.0
    %v283 = vmax.f32 %v251, 0.0
    %v284 = vmax.f32 %v252, 0.0
    %v285 = vmax.f32 %v253, 0.0
    %v286 = vmax.f32 %v254, 0.0
    %v287 = vmax.f32 %v255, 0.0
    %v288 = vmax.f32 %v256, 0.0
    %v289 = vmax.f32 %v257, 0.0
    %v290 = vmax.f32 %v258, 0.0
    %v291 = vmax.f32 %v259, 0.0
    %v292 = vmax.f32 %v260, 0.0
    %v293 = vmax.f32 %v261, 0.0
    %v294 = vmax.f32 %v262, 0.0
    %v295 = vmax.f32 %v263, 0.0
    %v296 = vmax.f32 %v264, 0.0
    %v297 = vmax.f32 %v265, 0.0
    %v298 = vmax.f32 %v266, 0.0
    %v299 = vmax.f32 %v267, 0.0
    %v300 = vmax.f32 %v268, 0.0
    %v301 = vmax.f32 %v269, 0.0
    %v302 = vmax.f32 %v270, 0.0
    %v303 = vmax.f32 %v271, 0.0
    %v304 = vmax.f32 %v272, 0.0
    %v305 = vmax.f32 %v273, 0.0
    %v306 = vmax.f32 %v274, 0.0
    %v308 = vperm.slane %v86, 0
    %v309 = vperm.slane %v86, 1
    %v312 = vmin.f32 %v308, %v153
    %v313 = vmin.f32 %v309, %v153
    %v314 = vmin.f32 %v308, %v154
    %v315 = vmin.f32 %v309, %v154
    %v316 = vmin.f32 %v308, %v155
    %v317 = vmin.f32 %v309, %v155
    %v318 = vmin.f32 %v308, %v156
    %v319 = vmin.f32 %v309, %v156
    %v320 = vmin.f32 %v308, %v157
    %v321 = vmin.f32 %v309, %v157
    %v322 = vmin.f32 %v308, %v158
    %v323 = vmin.f32 %v309, %v158
    %v324 = vmin.f32 %v308, %v159
    %v325 = vmin.f32 %v309, %v159
    %v326 = vmin.f32 %v308, %v160
    %v327 = vmin.f32 %v309, %v160
    %v328 = vmin.f32 %v308, %v161
    %v329 = vmin.f32 %v309, %v161
    %v330 = vmin.f32 %v308, %v162
    %v331 = vmin.f32 %v309, %v162
    %v332 = vmin.f32 %v308, %v163
    %v333 = vmin.f32 %v309, %v163
    %v334 = vmin.f32 %v308, %v164
    %v335 = vmin.f32 %v309, %v164
    %v336 = vmin.f32 %v308, %v165
    %v337 = vmin.f32 %v309, %v165
    %v338 = vmin.f32 %v308, %v166
    %v339 = vmin.f32 %v309, %v166
    %v340 = vmin.f32 %v308, %v167
    %v341 = vmin.f32 %v309, %v167
    %v342 = vmin.f32 %v308, %v168
    %v343 = vmin.f32 %v309, %v168
    %v345 = vperm.slane %v82, 0
    %v346 = vperm.slane %v82, 1
    %v349 = vmax.f32 %v345, %v137
    %v350 = vmax.f32 %v346, %v137
    %v351 = vmax.f32 %v345, %v138
    %v352 = vmax.f32 %v346, %v138
    %v353 = vmax.f32 %v345, %v139
    %v354 = vmax.f32 %v346, %v139
    %v355 = vmax.f32 %v345, %v140
    %v356 = vmax.f32 %v346, %v140
    %v357 = vmax.f32 %v345, %v141
    %v358 = vmax.f32 %v346, %v141
    %v359 = vmax.f32 %v345, %v142
    %v360 = vmax.f32 %v346, %v142
    %v361 = vmax.f32 %v345, %v143
    %v362 = vmax.f32 %v346, %v143
    %v363 = vmax.f32 %v345, %v144
    %v364 = vmax.f32 %v346, %v144
    %v365 = vmax.f32 %v345, %v145
    %v366 = vmax.f32 %v346, %v145
    %v367 = vmax.f32 %v345, %v146
    %v368 = vmax.f32 %v346, %v146
    %v369 = vmax.f32 %v345, %v147
    %v370 = vmax.f32 %v346, %v147
    %v371 = vmax.f32 %v345, %v148
    %v372 = vmax.f32 %v346, %v148
    %v373 = vmax.f32 %v345, %v149
    %v374 = vmax.f32 %v346, %v149
    %v375 = vmax.f32 %v345, %v150
    %v376 = vmax.f32 %v346, %v150
    %v377 = vmax.f32 %v345, %v151
    %v378 = vmax.f32 %v346, %v151
    %v379 = vmax.f32 %v345, %v152
    %v380 = vmax.f32 %v346, %v152
    %v381 = vsub.f32 %v312, %v349
    %v382 = vsub.f32 %v313, %v350
    %v383 = vsub.f32 %v314, %v351
    %v384 = vsub.f32 %v315, %v352
    %v385 = vsub.f32 %v316, %v353
    %v386 = vsub.f32 %v317, %v354
    %v387 = vsub.f32 %v318, %v355
    %v388 = vsub.f32 %v319, %v356
    %v389 = vsub.f32 %v320, %v357
    %v390 = vsub.f32 %v321, %v358
    %v391 = vsub.f32 %v322, %v359
    %v392 = vsub.f32 %v323, %v360
    %v393 = vsub.f32 %v324, %v361
    %v394 = vsub.f32 %v325, %v362
    %v395 = vsub.f32 %v326, %v363
    %v396 = vsub.f32 %v327, %v364
    %v397 = vsub.f32 %v328, %v365
    %v398 = vsub.f32 %v329, %v366
    %v399 = vsub.f32 %v330, %v367
    %v400 = vsub.f32 %v331, %v368
    %v401 = vsub.f32 %v332, %v369
    %v402 = vsub.f32 %v333, %v370
    %v403 = vsub.f32 %v334, %v371
    %v404 = vsub.f32 %v335, %v372
    %v405 = vsub.f32 %v336, %v373
    %v406 = vsub.f32 %v337, %v374
    %v407 = vsub.f32 %v338, %v375
    %v408 = vsub.f32 %v339, %v376
    %v409 = vsub.f32 %v340, %v377
    %v410 = vsub.f32 %v341, %v378
    %v411 = vsub.f32 %v342, %v379
    %v412 = vsub.f32 %v343, %v380
    %v413 = vmax.f32 %v381, 0.0
    %v414 = vmax.f32 %v382, 0.0
    %v415 = vmax.f32 %v383, 0.0
    %v416 = vmax.f32 %v384, 0.0
    %v417 = vmax.f32 %v385, 0.0
    %v418 = vmax.f32 %v386, 0.0
    %v419 = vmax.f32 %v387, 0.0
    %v420 = vmax.f32 %v388, 0.0
    %v421 = vmax.f32 %v389, 0.0
    %v422 = vmax.f32 %v390, 0.0
    %v423 = vmax.f32 %v391, 0.0
    %v424 = vmax.f32 %v392, 0.0
    %v425 = vmax.f32 %v393, 0.0
    %v426 = vmax.f32 %v394, 0.0
    %v427 = vmax.f32 %v395, 0.0
    %v428 = vmax.f32 %v396, 0.0
    %v429 = vmax.f32 %v397, 0.0
    %v430 = vmax.f32 %v398, 0.0
    %v431 = vmax.f32 %v399, 0.0
    %v432 = vmax.f32 %v400, 0.0
    %v433 = vmax.f32 %v401, 0.0
    %v434 = vmax.f32 %v402, 0.0
    %v435 = vmax.f32 %v403, 0.0
    %v436 = vmax.f32 %v404, 0.0
    %v437 = vmax.f32 %v405, 0.0
    %v438 = vmax.f32 %v406, 0.0
    %v439 = vmax.f32 %v407, 0.0
    %v440 = vmax.f32 %v408, 0.0
    %v441 = vmax.f32 %v409, 0.0
    %v442 = vmax.f32 %v410, 0.0
    %v443 = vmax.f32 %v411, 0.0
    %v444 = vmax.f32 %v412, 0.0
    %v445 = vld [vmem:[#allocation8] sm:$0xff]
    %v446 = vld [vmem:[#allocation8 + $0x8] sm:$0xff]
    %v447 = vld [vmem:[#allocation8 + $0x10] sm:$0xff]
    %v448 = vld [vmem:[#allocation8 + $0x18] sm:$0xff]
    %v449 = vld [vmem:[#allocation8 + $0x20] sm:$0xff]
    %v450 = vld [vmem:[#allocation8 + $0x28] sm:$0xff]
    %v451 = vld [vmem:[#allocation8 + $0x30] sm:$0xff]
    %v452 = vld [vmem:[#allocation8 + $0x38] sm:$0xff]
    %v453 = vld [vmem:[#allocation8 + $0x40] sm:$0xff]
    %v454 = vld [vmem:[#allocation8 + $0x48] sm:$0xff]
    %v455 = vld [vmem:[#allocation8 + $0x50] sm:$0xff]
    %v456 = vld [vmem:[#allocation8 + $0x58] sm:$0xff]
    %v457 = vld [vmem:[#allocation8 + $0x60] sm:$0xff]
    %v458 = vld [vmem:[#allocation8 + $0x68] sm:$0xff]
    %v459 = vld [vmem:[#allocation8 + $0x70] sm:$0xff]
    %v460 = vld [vmem:[#allocation8 + $0x78] sm:$0xff]
    %v461 = vld [vmem:[#allocation8 + $0x80] sm:$0xff]
    %v462 = vld [vmem:[#allocation8 + $0x88] sm:$0xff]
    %v463 = vld [vmem:[#allocation8 + $0x90] sm:$0xff]
    %v464 = vld [vmem:[#allocation8 + $0x98] sm:$0xff]
    %v465 = vld [vmem:[#allocation8 + $0xa0] sm:$0xff]
    %v466 = vld [vmem:[#allocation8 + $0xa8] sm:$0xff]
    %v467 = vld [vmem:[#allocation8 + $0xb0] sm:$0xff]
    %v468 = vld [vmem:[#allocation8 + $0xb8] sm:$0xff]
    %v469 = vld [vmem:[#allocation8 + $0xc0] sm:$0xff]
    %v470 = vld [vmem:[#allocation8 + $0xc8] sm:$0xff]
    %v471 = vld [vmem:[#allocation8 + $0xd0] sm:$0xff]
    %v472 = vld [vmem:[#allocation8 + $0xd8] sm:$0xff]
    %v473 = vld [vmem:[#allocation8 + $0xe0] sm:$0xff]
    %v474 = vld [vmem:[#allocation8 + $0xe8] sm:$0xff]
    %v475 = vld [vmem:[#allocation8 + $0xf0] sm:$0xff]
    %v476 = vld [vmem:[#allocation8 + $0xf8] sm:$0xff]
    %477 = vmatpush.msra.mxu0 %v443
    %478 = vmatpush.msra.mxu0 %v441
    %479 = vmatpush.msra.mxu0 %v439
    %480 = vmatpush.msra.mxu0 %v437
    %481 = vmatpush.msra.mxu0 %v435
    %482 = vmatpush.msra.mxu0 %v433
    %483 = vmatpush.msra.mxu0 %v431
    %484 = vmatpush.msra.mxu0 %v429
    %485 = vmatpush.msra.mxu0 %v427
    %486 = vmatpush.msra.mxu0 %v425
    %487 = vmatpush.msra.mxu0 %v423
    %488 = vmatpush.msra.mxu0 %v421
    %489 = vmatpush.msra.mxu0 %v419
    %490 = vmatpush.msra.mxu0 %v417
    %491 = vmatpush.msra.mxu0 %v415
    %492 = vmatpush.msra.mxu0 %v413
    %493 = vmatmul.f32.gmra.mxu0 %v445
    %v494 = vpop.f32.mrf.mxu0
    %v495 = vadd.f32 0.0, %v494
    %496 = vmatmul.f32.gmra.mxu0 %v446
    %v497 = vpop.f32.mrf.mxu0
    %v498 = vadd.f32 0.0, %v497
    %499 = vmatmul.f32.gmra.mxu0 %v447
    %v500 = vpop.f32.mrf.mxu0
    %v501 = vadd.f32 0.0, %v500
    %502 = vmatmul.f32.gmra.mxu0 %v448
    %v503 = vpop.f32.mrf.mxu0
    %v504 = vadd.f32 0.0, %v503
    %505 = vmatmul.f32.gmra.mxu0 %v449
    %v506 = vpop.f32.mrf.mxu0
    %v507 = vadd.f32 0.0, %v506
    %508 = vmatmul.f32.gmra.mxu0 %v450
    %v509 = vpop.f32.mrf.mxu0
    %v510 = vadd.f32 0.0, %v509
    %511 = vmatmul.f32.gmra.mxu0 %v451
    %v512 = vpop.f32.mrf.mxu0
    %v513 = vadd.f32 0.0, %v512
    %514 = vmatmul.f32.gmra.mxu0 %v452
    %v515 = vpop.f32.mrf.mxu0
    %v516 = vadd.f32 0.0, %v515
    %517 = vmatmul.f32.gmra.mxu0 %v453
    %v518 = vpop.f32.mrf.mxu0
    %v519 = vadd.f32 0.0, %v518
    %520 = vmatmul.f32.gmra.mxu0 %v454
    %v521 = vpop.f32.mrf.mxu0
    %v522 = vadd.f32 0.0, %v521
    %523 = vmatmul.f32.gmra.mxu0 %v455
    %v524 = vpop.f32.mrf.mxu0
    %v525 = vadd.f32 0.0, %v524
    %526 = vmatmul.f32.gmra.mxu0 %v456
    %v527 = vpop.f32.mrf.mxu0
    %v528 = vadd.f32 0.0, %v527
    %529 = vmatmul.f32.gmra.mxu0 %v457
    %v530 = vpop.f32.mrf.mxu0
    %v531 = vadd.f32 0.0, %v530
    %532 = vmatmul.f32.gmra.mxu0 %v458
    %v533 = vpop.f32.mrf.mxu0
    %v534 = vadd.f32 0.0, %v533
    %535 = vmatmul.f32.gmra.mxu0 %v459
    %v536 = vpop.f32.mrf.mxu0
    %v537 = vadd.f32 0.0, %v536
    %538 = vmatmul.f32.gmra.mxu0 %v460
    %v539 = vpop.f32.mrf.mxu0
    %v540 = vadd.f32 0.0, %v539
    %541 = vmatmul.f32.gmra.mxu0 %v461
    %v542 = vpop.f32.mrf.mxu0
    %v543 = vadd.f32 0.0, %v542
    %544 = vmatmul.f32.gmra.mxu0 %v462
    %v545 = vpop.f32.mrf.mxu0
    %v546 = vadd.f32 0.0, %v545
    %547 = vmatmul.f32.gmra.mxu0 %v463
    %v548 = vpop.f32.mrf.mxu0
    %v549 = vadd.f32 0.0, %v548
    %550 = vmatmul.f32.gmra.mxu0 %v464
    %v551 = vpop.f32.mrf.mxu0
    %v552 = vadd.f32 0.0, %v551
    %553 = vmatmul.f32.gmra.mxu0 %v465
    %v554 = vpop.f32.mrf.mxu0
    %v555 = vadd.f32 0.0, %v554
    %556 = vmatmul.f32.gmra.mxu0 %v466
    %v557 = vpop.f32.mrf.mxu0
    %v558 = vadd.f32 0.0, %v557
    %559 = vmatmul.f32.gmra.mxu0 %v467
    %v560 = vpop.f32.mrf.mxu0
    %v561 = vadd.f32 0.0, %v560
    %562 = vmatmul.f32.gmra.mxu0 %v468
    %v563 = vpop.f32.mrf.mxu0
    %v564 = vadd.f32 0.0, %v563
    %565 = vmatmul.f32.gmra.mxu0 %v469
    %v566 = vpop.f32.mrf.mxu0
    %v567 = vadd.f32 0.0, %v566
    %568 = vmatmul.f32.gmra.mxu0 %v470
    %v569 = vpop.f32.mrf.mxu0
    %v570 = vadd.f32 0.0, %v569
    %571 = vmatmul.f32.gmra.mxu0 %v471
    %v572 = vpop.f32.mrf.mxu0
    %v573 = vadd.f32 0.0, %v572
    %574 = vmatmul.f32.gmra.mxu0 %v472
    %v575 = vpop.f32.mrf.mxu0
    %v576 = vadd.f32 0.0, %v575
    %577 = vmatmul.f32.gmra.mxu0 %v473
    %v578 = vpop.f32.mrf.mxu0
    %v579 = vadd.f32 0.0, %v578
    %580 = vmatmul.f32.gmra.mxu0 %v474
    %v581 = vpop.f32.mrf.mxu0
    %v582 = vadd.f32 0.0, %v581
    %583 = vmatmul.f32.gmra.mxu0 %v475
    %v584 = vpop.f32.mrf.mxu0
    %v585 = vadd.f32 0.0, %v584
    %586 = vmatmul.f32.gmra.mxu0 %v476
    %v587 = vpop.f32.mrf.mxu0
    %v588 = vadd.f32 0.0, %v587
    %589 = vdwg.mxu0
    %590 = vmatpush.msra.mxu0 %v444
    %591 = vmatpush.msra.mxu0 %v442
    %592 = vmatpush.msra.mxu0 %v440
    %593 = vmatpush.msra.mxu0 %v438
    %594 = vmatpush.msra.mxu0 %v436
    %595 = vmatpush.msra.mxu0 %v434
    %596 = vmatpush.msra.mxu0 %v432
    %597 = vmatpush.msra.mxu0 %v430
    %598 = vmatpush.msra.mxu0 %v428
    %599 = vmatpush.msra.mxu0 %v426
    %600 = vmatpush.msra.mxu0 %v424
    %601 = vmatpush.msra.mxu0 %v422
    %602 = vmatpush.msra.mxu0 %v420
    %603 = vmatpush.msra.mxu0 %v418
    %604 = vmatpush.msra.mxu0 %v416
    %605 = vmatpush.msra.mxu0 %v414
    %606 = vmatmul.f32.gmra.mxu0 %v445
    %v607 = vpop.f32.mrf.mxu0
    %v608 = vadd.f32 0.0, %v607
    %609 = vmatmul.f32.gmra.mxu0 %v446
    %v610 = vpop.f32.mrf.mxu0
    %v611 = vadd.f32 0.0, %v610
    %612 = vmatmul.f32.gmra.mxu0 %v447
    %v613 = vpop.f32.mrf.mxu0
    %v614 = vadd.f32 0.0, %v613
    %615 = vmatmul.f32.gmra.mxu0 %v448
    %v616 = vpop.f32.mrf.mxu0
    %v617 = vadd.f32 0.0, %v616
    %618 = vmatmul.f32.gmra.mxu0 %v449
    %v619 = vpop.f32.mrf.mxu0
    %v620 = vadd.f32 0.0, %v619
    %621 = vmatmul.f32.gmra.mxu0 %v450
    %v622 = vpop.f32.mrf.mxu0
    %v623 = vadd.f32 0.0, %v622
    %624 = vmatmul.f32.gmra.mxu0 %v451
    %v625 = vpop.f32.mrf.mxu0
    %v626 = vadd.f32 0.0, %v625
    %627 = vmatmul.f32.gmra.mxu0 %v452
    %v628 = vpop.f32.mrf.mxu0
    %v629 = vadd.f32 0.0, %v628
    %630 = vmatmul.f32.gmra.mxu0 %v453
    %v631 = vpop.f32.mrf.mxu0
    %v632 = vadd.f32 0.0, %v631
    %633 = vmatmul.f32.gmra.mxu0 %v454
    %v634 = vpop.f32.mrf.mxu0
    %v635 = vadd.f32 0.0, %v634
    %636 = vmatmul.f32.gmra.mxu0 %v455
    %v637 = vpop.f32.mrf.mxu0
    %v638 = vadd.f32 0.0, %v637
    %639 = vmatmul.f32.gmra.mxu0 %v456
    %v640 = vpop.f32.mrf.mxu0
    %v641 = vadd.f32 0.0, %v640
    %642 = vmatmul.f32.gmra.mxu0 %v457
    %v643 = vpop.f32.mrf.mxu0
    %v644 = vadd.f32 0.0, %v643
    %645 = vmatmul.f32.gmra.mxu0 %v458
    %v646 = vpop.f32.mrf.mxu0
    %v647 = vadd.f32 0.0, %v646
    %648 = vmatmul.f32.gmra.mxu0 %v459
    %v649 = vpop.f32.mrf.mxu0
    %v650 = vadd.f32 0.0, %v649
    %651 = vmatmul.f32.gmra.mxu0 %v460
    %v652 = vpop.f32.mrf.mxu0
    %v653 = vadd.f32 0.0, %v652
    %654 = vmatmul.f32.gmra.mxu0 %v461
    %v655 = vpop.f32.mrf.mxu0
    %v656 = vadd.f32 0.0, %v655
    %657 = vmatmul.f32.gmra.mxu0 %v462
    %v658 = vpop.f32.mrf.mxu0
    %v659 = vadd.f32 0.0, %v658
    %660 = vmatmul.f32.gmra.mxu0 %v463
    %v661 = vpop.f32.mrf.mxu0
    %v662 = vadd.f32 0.0, %v661
    %663 = vmatmul.f32.gmra.mxu0 %v464
    %v664 = vpop.f32.mrf.mxu0
    %v665 = vadd.f32 0.0, %v664
    %666 = vmatmul.f32.gmra.mxu0 %v465
    %v667 = vpop.f32.mrf.mxu0
    %v668 = vadd.f32 0.0, %v667
    %669 = vmatmul.f32.gmra.mxu0 %v466
    %v670 = vpop.f32.mrf.mxu0
    %v671 = vadd.f32 0.0, %v670
    %672 = vmatmul.f32.gmra.mxu0 %v467
    %v673 = vpop.f32.mrf.mxu0
    %v674 = vadd.f32 0.0, %v673
    %675 = vmatmul.f32.gmra.mxu0 %v468
    %v676 = vpop.f32.mrf.mxu0
    %v677 = vadd.f32 0.0, %v676
    %678 = vmatmul.f32.gmra.mxu0 %v469
    %v679 = vpop.f32.mrf.mxu0
    %v680 = vadd.f32 0.0, %v679
    %681 = vmatmul.f32.gmra.mxu0 %v470
    %v682 = vpop.f32.mrf.mxu0
    %v683 = vadd.f32 0.0, %v682
    %684 = vmatmul.f32.gmra.mxu0 %v471
    %v685 = vpop.f32.mrf.mxu0
    %v686 = vadd.f32 0.0, %v685
    %687 = vmatmul.f32.gmra.mxu0 %v472
    %v688 = vpop.f32.mrf.mxu0
    %v689 = vadd.f32 0.0, %v688
    %690 = vmatmul.f32.gmra.mxu0 %v473
    %v691 = vpop.f32.mrf.mxu0
    %v692 = vadd.f32 0.0, %v691
    %693 = vmatmul.f32.gmra.mxu0 %v474
    %v694 = vpop.f32.mrf.mxu0
    %v695 = vadd.f32 0.0, %v694
    %696 = vmatmul.f32.gmra.mxu0 %v475
    %v697 = vpop.f32.mrf.mxu0
    %v698 = vadd.f32 0.0, %v697
    %699 = vmatmul.f32.gmra.mxu0 %v476
    %v700 = vpop.f32.mrf.mxu0
    %v701 = vadd.f32 0.0, %v700
    %702 = vdwg.mxu0
    %v703 = vmul.f32 %v275, %v495
    %v704 = vmul.f32 %v276, %v608
    %v705 = vmul.f32 %v277, %v498
    %v706 = vmul.f32 %v278, %v611
    %v707 = vmul.f32 %v279, %v501
    %v708 = vmul.f32 %v280, %v614
    %v709 = vmul.f32 %v281, %v504
    %v710 = vmul.f32 %v282, %v617
    %v711 = vmul.f32 %v283, %v507
    %v712 = vmul.f32 %v284, %v620
    %v713 = vmul.f32 %v285, %v510
    %v714 = vmul.f32 %v286, %v623
    %v715 = vmul.f32 %v287, %v513
    %v716 = vmul.f32 %v288, %v626
    %v717 = vmul.f32 %v289, %v516
    %v718 = vmul.f32 %v290, %v629
    %v719 = vmul.f32 %v291, %v519
    %v720 = vmul.f32 %v292, %v632
    %v721 = vmul.f32 %v293, %v522
    %v722 = vmul.f32 %v294, %v635
    %v723 = vmul.f32 %v295, %v525
    %v724 = vmul.f32 %v296, %v638
    %v725 = vmul.f32 %v297, %v528
    %v726 = vmul.f32 %v298, %v641
    %v727 = vmul.f32 %v299, %v531
    %v728 = vmul.f32 %v300, %v644
    %v729 = vmul.f32 %v301, %v534
    %v730 = vmul.f32 %v302, %v647
    %v731 = vmul.f32 %v303, %v537
    %v732 = vmul.f32 %v304, %v650
    %v733 = vmul.f32 %v305, %v540
    %v734 = vmul.f32 %v306, %v653
    %v735 = vadd.f32 %v703, %v705
    %v736 = vadd.f32 %v735, %v707
    %v737 = vadd.f32 %v736, %v709
    %v738 = vadd.f32 %v737, %v711
    %v739 = vadd.f32 %v738, %v713
    %v740 = vadd.f32 %v739, %v715
    %v741 = vadd.f32 %v740, %v717
    %v742 = vadd.f32 %v741, %v719
    %v743 = vadd.f32 %v742, %v721
    %v744 = vadd.f32 %v743, %v723
    %v745 = vadd.f32 %v744, %v725
    %v746 = vadd.f32 %v745, %v727
    %v747 = vadd.f32 %v746, %v729
    %v748 = vadd.f32 %v747, %v731
    %v749 = vadd.f32 %v748, %v733
    %v750 = vrot.slane %v749, 4
    %v751 = vadd.f32 %v749, %v750
    %v752 = vrot.slane %v751, 2
    %v753 = vadd.f32 %v751, %v752
    %v754 = vrot.slane %v753, 1
    %v755 = vadd.f32 %v753, %v754
    %v756 = vadd.f32 %v704, %v706
    %v757 = vadd.f32 %v756, %v708
    %v758 = vadd.f32 %v757, %v710
    %v759 = vadd.f32 %v758, %v712
    %v760 = vadd.f32 %v759, %v714
    %v761 = vadd.f32 %v760, %v716
    %v762 = vadd.f32 %v761, %v718
    %v763 = vadd.f32 %v762, %v720
    %v764 = vadd.f32 %v763, %v722
    %v765 = vadd.f32 %v764, %v724
    %v766 = vadd.f32 %v765, %v726
    %v767 = vadd.f32 %v766, %v728
    %v768 = vadd.f32 %v767, %v730
    %v769 = vadd.f32 %v768, %v732
    %v770 = vadd.f32 %v769, %v734
    %v771 = vrot.slane %v770, 4
    %v772 = vadd.f32 %v770, %v771
    %v773 = vrot.slane %v772, 2
    %v774 = vadd.f32 %v772, %v773
    %v775 = vrot.slane %v774, 1
    %v776 = vadd.f32 %v774, %v775
    %v777 = vmul.f32 %v275, %v543
    %v778 = vmul.f32 %v276, %v656
    %v779 = vmul.f32 %v277, %v546
    %v780 = vmul.f32 %v278, %v659
    %v781 = vmul.f32 %v279, %v549
    %v782 = vmul.f32 %v280, %v662
    %v783 = vmul.f32 %v281, %v552
    %v784 = vmul.f32 %v282, %v665
    %v785 = vmul.f32 %v283, %v555
    %v786 = vmul.f32 %v284, %v668
    %v787 = vmul.f32 %v285, %v558
    %v788 = vmul.f32 %v286, %v671
    %v789 = vmul.f32 %v287, %v561
    %v790 = vmul.f32 %v288, %v674
    %v791 = vmul.f32 %v289, %v564
    %v792 = vmul.f32 %v290, %v677
    %v793 = vmul.f32 %v291, %v567
    %v794 = vmul.f32 %v292, %v680
    %v795 = vmul.f32 %v293, %v570
    %v796 = vmul.f32 %v294, %v683
    %v797 = vmul.f32 %v295, %v573
    %v798 = vmul.f32 %v296, %v686
    %v799 = vmul.f32 %v297, %v576
    %v800 = vmul.f32 %v298, %v689
    %v801 = vmul.f32 %v299, %v579
    %v802 = vmul.f32 %v300, %v692
    %v803 = vmul.f32 %v301, %v582
    %v804 = vmul.f32 %v302, %v695
    %v805 = vmul.f32 %v303, %v585
    %v806 = vmul.f32 %v304, %v698
    %v807 = vmul.f32 %v305, %v588
    %v808 = vmul.f32 %v306, %v701
    %v809 = vadd.f32 %v777, %v779
    %v810 = vadd.f32 %v809, %v781
    %v811 = vadd.f32 %v810, %v783
    %v812 = vadd.f32 %v811, %v785
    %v813 = vadd.f32 %v812, %v787
    %v814 = vadd.f32 %v813, %v789
    %v815 = vadd.f32 %v814, %v791
    %v816 = vadd.f32 %v815, %v793
    %v817 = vadd.f32 %v816, %v795
    %v818 = vadd.f32 %v817, %v797
    %v819 = vadd.f32 %v818, %v799
    %v820 = vadd.f32 %v819, %v801
    %v821 = vadd.f32 %v820, %v803
    %v822 = vadd.f32 %v821, %v805
    %v823 = vadd.f32 %v822, %v807
    %v824 = vrot.slane %v823, 4
    %v825 = vadd.f32 %v823, %v824
    %v826 = vrot.slane %v825, 2
    %v827 = vadd.f32 %v825, %v826
    %v828 = vrot.slane %v827, 1
    %v829 = vadd.f32 %v827, %v828
    %v830 = vadd.f32 %v778, %v780
    %v831 = vadd.f32 %v830, %v782
    %v832 = vadd.f32 %v831, %v784
    %v833 = vadd.f32 %v832, %v786
    %v834 = vadd.f32 %v833, %v788
    %v835 = vadd.f32 %v834, %v790
    %v836 = vadd.f32 %v835, %v792
    %v837 = vadd.f32 %v836, %v794
    %v838 = vadd.f32 %v837, %v796
    %v839 = vadd.f32 %v838, %v798
    %v840 = vadd.f32 %v839, %v800
    %v841 = vadd.f32 %v840, %v802
    %v842 = vadd.f32 %v841, %v804
    %v843 = vadd.f32 %v842, %v806
    %v844 = vadd.f32 %v843, %v808
    %v845 = vrot.slane %v844, 4
    %v846 = vadd.f32 %v844, %v845
    %v847 = vrot.slane %v846, 2
    %v848 = vadd.f32 %v846, %v847
    %v849 = vrot.slane %v848, 1
    %v850 = vadd.f32 %v848, %v849
    %v851 = vmax.f32 %v755, %v829
    %v852 = vmax.f32 %v776, %v850
    %v854 = vperm.slane %v87, 0
    %v855 = vperm.slane %v87, 1
    %v858 = vsub.f32 %v851, %v854
    %v859 = vsub.f32 %v852, %v855
    %v860 = vmax.f32 %v858, 0.0
    %v861 = vmax.f32 %v859, 0.0
    %v864 = vrot.slane %v861, 7
    %vm865 = vcmask 1040384
    %v866 = vsel %vm865, %v860, %v864
    %v868 = vlaneseq
    %vm869 = vcmp.ge.s32.totalorder %v868, 0
    %vm870 = vcmp.lt.s32.totalorder %v868, 256
    %vm871 = vmand %vm869, %vm870
    %872 = vst.msk [vmem:[#allocation10] sm:$0x3] %vm871, %v866
    %vm873 = vcmp.eq.s32.totalorder %v89, 0
    %v874 = vsel %vm865, %v854, 0.0
    %v875 = vsel %vm865, %v855, 0.0
    %v876 = vadd.f32 %v874, %v875
    %877 = vadd.xlane.f32.xlu0 %v876
    %v878 = vpop.xlane.xlu0 %877
    %v879 = vrot.slane %v878, 4
    %v880 = vadd.f32 %v878, %v879
    %v881 = vrot.slane %v880, 2
    %v882 = vadd.f32 %v880, %v881
    %v883 = vrot.slane %v882, 1
    %v884 = vadd.f32 %v882, %v883
    %s885 = vtos %v884
    %v886 = vstv %s885
    %v887 = vsel %vm873, %v886, 0.0
    %vm888 = vcmp.eq.s32.totalorder %v89, 1
    %v889 = vsel %vm865, %v860, 0.0
    %v890 = vsel %vm865, %v861, 0.0
    %v891 = vadd.f32 %v889, %v890
    %892 = vadd.xlane.f32.xlu0 %v891
    %v893 = vpop.xlane.xlu0 %892
    %v894 = vrot.slane %v893, 4
    %v895 = vadd.f32 %v893, %v894
    %v896 = vrot.slane %v895, 2
    %v897 = vadd.f32 %v895, %v896
    %v898 = vrot.slane %v897, 1
    %v899 = vadd.f32 %v897, %v898
    %s900 = vtos %v899
    %v901 = vstv %s900
    %v902 = vsel %vm888, %v901, 0.0
    %v903 = vadd.f32 %v887, %v902
    %vm904 = vcmp.eq.s32.totalorder %v89, 2
    %v905 = vsub.f32 %v755, %v854
    %v906 = vsub.f32 %v776, %v855
    %v907 = vmax.f32 %v905, 0.0
    %v908 = vmax.f32 %v906, 0.0
    %v909 = vsel %vm865, %v907, 0.0
    %v910 = vsel %vm865, %v908, 0.0
    %v911 = vadd.f32 %v909, %v910
    %912 = vadd.xlane.f32.xlu0 %v911
    %v913 = vpop.xlane.xlu0 %912
    %v914 = vrot.slane %v913, 4
    %v915 = vadd.f32 %v913, %v914
    %v916 = vrot.slane %v915, 2
    %v917 = vadd.f32 %v915, %v916
    %v918 = vrot.slane %v917, 1
    %v919 = vadd.f32 %v917, %v918
    %s920 = vtos %v919
    %v921 = vstv %s920
    %v922 = vsel %vm904, %v921, 0.0
    %v923 = vadd.f32 %v903, %v922
    %vm924 = vcmp.eq.s32.totalorder %v89, 3
    %v925 = vsub.f32 %v829, %v854
    %v926 = vsub.f32 %v850, %v855
    %v927 = vmax.f32 %v925, 0.0
    %v928 = vmax.f32 %v926, 0.0
    %v929 = vsel %vm865, %v927, 0.0
    %v930 = vsel %vm865, %v928, 0.0
    %v931 = vadd.f32 %v929, %v930
    %932 = vadd.xlane.f32.xlu0 %v931
    %v933 = vpop.xlane.xlu0 %932
    %v934 = vrot.slane %v933, 4
    %v935 = vadd.f32 %v933, %v934
    %v936 = vrot.slane %v935, 2
    %v937 = vadd.f32 %v935, %v936
    %v938 = vrot.slane %v937, 1
    %v939 = vadd.f32 %v937, %v938
    %s940 = vtos %v939
    %v941 = vstv %s940
    %v942 = vsel %vm924, %v941, 0.0
    %v943 = vadd.f32 %v923, %v942
    %944 = vst [vmem:[#allocation11] sm:$0xff] %v943
    // Predicated region
    $region38: #{tpu_custom_call.1} parent=1 // pred_check
      _
    $region39: #{tpu_custom_call.1} parent=1 // pred_check_branch
      %946 = sbr.rel (0) target = $region41
    $region40: #{tpu_custom_call.1} parent=1 // pred_region
      %948 = vsyncadd [#allocation4], 0
      %s950 = sshll.u32 [#allocation10], 4
      %s951 = int_to_ptr.vmem [resolvable:$true] %s950
      %s952 = sshll.u32 %s5, 4
      %s953 = int_to_ptr.hbm [resolvable:$true] %s952
      %955 = dma.vmem_to_hbm [thread:$0]  %s951, 32, %s953, [#allocation4]
    $region41: #{tpu_custom_call.1} parent=1 // pred_fallthru
      _
    // Predicated region
    $region42: #{tpu_custom_call.1} parent=1 // pred_check
      _
    $region43: #{tpu_custom_call.1} parent=1 // pred_check_branch
      %957 = sbr.rel (0) target = $region45
    $region44: #{tpu_custom_call.1} parent=1 // pred_region
      %959 = vsyncadd [#allocation12], 0
      %s961 = sshll.u32 [#allocation11], 4
      %s962 = int_to_ptr.vmem [resolvable:$true] %s961
      %s963 = sshll.u32 %s6, 4
      %s964 = int_to_ptr.hbm [resolvable:$true] %s963
      %966 = dma.vmem_to_hbm [thread:$0]  %s962, 128, %s964, [#allocation12]
    $region45: #{tpu_custom_call.1} parent=1 // pred_fallthru
      _
    // Predicated region
    $region46: #{tpu_custom_call.1} parent=1 // pred_check
      _
    $region47: #{tpu_custom_call.1} parent=1 // pred_check_branch
      %968 = sbr.rel (0) target = $region49
    $region48: #{tpu_custom_call.1} parent=1 // pred_region
      %970 = dma.done [#allocation4], 32
    $region49: #{tpu_custom_call.1} parent=1 // pred_fallthru
      _
    // Predicated region
    $region50: #{tpu_custom_call.1} parent=1 // pred_check
      _
    $region51: #{tpu_custom_call.1} parent=1 // pred_check_branch
      %972 = sbr.rel (0) target = $region53
    $region52: #{tpu_custom_call.1} parent=1 // pred_region
      %974 = dma.done [#allocation12], 128
    $region53: #{tpu_custom_call.1} parent=1 // pred_fallthru
      _
    %975 = vsyncpa [#allocation3], 1
    %976 = vsyncpa [#allocation6], 1
    %977 = vsyncpa [#allocation9], 1
    %978 = vsyncpa [#allocation4], 1
    %979 = vsyncpa [#allocation12], 1

</llo_original>
